<compile_context>
chip_gen: v7x
topology: tpu7x:2x2x1
jax: 0.10.0
libtpu: 0.0.40
codegen_flags: <defaults>
</compile_context>

<pallas_src>
import numpy as np
import jax
import jax.numpy as jnp
from jax.experimental import pallas as pl
from jax.experimental.pallas import tpu as pltpu

NEG_SLOPE = 0.01      # F.leaky_relu default negative_slope
LANES = 128           # TPU lane width: every feature axis is zero-padded to this
SUBLANE_PAD = 16      # row padding (bf16 sublane tile)
NUM_LAYERS = 5


def _round_up(x, m):
    return (x + m - 1) // m * m


# --------------------------------- Pallas kernel ---------------------------------
def make_qgnn_kernel(num_layers):
    """Kernel operands:
       h0_ref : (Np, 128)        f32   lane-padded node embeddings
       S_ref  : (Ep, Np)         bf16  one-hot source-gather matrix
       A_ref  : (Np, Ep)         bf16  1/indeg mean-aggregation matrix
       W_ref  : (3L+2, 128, 128) bf16  per layer [W1a^T, W2a^T, W2b^T], then l1_w^T, l2_w^T
       EB_ref : (L, Ep, 128)     f32   hoisted edge-constant term  w_e @ W1b^T
       B_ref  : (L+2, 1, 128)    f32   per-layer linear2 bias, then l1_b, l2_b
    """
    def kernel(h0_ref, S_ref, A_ref, W_ref, EB_ref, B_ref, out_ref):
        S = S_ref[...]
        A = A_ref[...]
        h = h0_ref[...]

        def mxu(x_bf16, w_bf16):            # bf16 MXU matmul, f32 accumulation
            return jnp.dot(x_bf16, w_bf16, preferred_element_type=jnp.float32)

        for li in range(num_layers):        # static unroll: 5 stacked QConv layers
            h_bf = h.astype(jnp.bfloat16)
            w1a = W_ref[3 * li + 0]         # static views into the weight slab (free)
            w2a = W_ref[3 * li + 1]
            w2b = W_ref[3 * li + 2]
            # message path, reassociated: (S @ h) @ W1a == S @ (h @ W1a); edge term hoisted
            xp = mxu(h_bf, w1a)                                         # (Np, 128)
            msg = mxu(S, xp.astype(jnp.bfloat16)) + EB_ref[li]          # (Ep, 128)
            msg = jnp.where(msg >= 0.0, msg, NEG_SLOPE * msg)           # leaky_relu (f32 VPU)
            h_n = mxu(A, msg.astype(jnp.bfloat16))                      # (Np, 128) mean over in-edges
            # linear2(cat([h, h_N])) as split matmul + bias, then ReLU
            h = jnp.maximum(
                mxu(h_bf, w2a) + mxu(h_n.astype(jnp.bfloat16), w2b) + B_ref[li],
                0.0)                                                    # (Np, 128)

        h_bf = h.astype(jnp.bfloat16)
        z = jnp.maximum(mxu(h_bf, W_ref[3 * num_layers]) + B_ref[num_layers], 0.0)
        out_ref[...] = (mxu(z.astype(jnp.bfloat16), W_ref[3 * num_layers + 1])
                        + B_ref[num_layers + 1])

    return kernel


# ------------------------------ host-side packing ------------------------------
def pack_inputs(h0, w_e, src, dst, N, params):
    """Pre-transpose / pre-split / zero-pad all weights into lane-dense slabs, hoist the
    edge-constant term of linear1, and build the dense gather (S) / mean (A) matrices.
    Collapses 24 tiny operands into 6 DMA-friendly ones."""
    E = int(w_e.shape[0])
    Np = _round_up(N, SUBLANE_PAD)
    Ep = _round_up(E, SUBLANE_PAD)
    L = NUM_LAYERS

    def pad2(x, rows=LANES, cols=LANES):
        out = np.zeros((rows, cols), np.float32)
        x = np.asarray(x, np.float32)
        out[: x.shape[0], : x.shape[1]] = x
        return out

    w_e_np = np.asarray(w_e, np.float32)
    W_list, EB_list, B_list = [], [], []
    for i in range(1, L + 1):
        w1 = np.asarray(params[f"c{i}_w1"], np.float32)     # (inter, f_in + 3)
        w2 = np.asarray(params[f"c{i}_w2"], np.float32)     # (h_feats, f_in + inter)
        b2 = np.asarray(params[f"c{i}_b2"], np.float32)     # (1, h_feats)
        f_in = w1.shape[1] - 3
        W_list += [pad2(w1[:, :f_in].T),                    # W1a^T : (f_in, inter)
                   pad2(w2[:, :f_in].T),                    # W2a^T : (f_in, out)
                   pad2(w2[:, f_in:].T)]                    # W2b^T : (inter, out)
        EB_list.append(pad2(w_e_np @ w1[:, f_in:].T, rows=Ep))   # hoisted edge term (E, inter)
        B_list.append(pad2(b2, rows=1))
    W_list += [pad2(np.asarray(params["l1_w"], np.float32).T),
               pad2(np.asarray(params["l2_w"], np.float32).T)]
    B_list += [pad2(np.asarray(params["l1_b"], np.float32), rows=1),
               pad2(np.asarray(params["l2_b"], np.float32), rows=1)]

    W_slab = jnp.asarray(np.stack(W_list), jnp.bfloat16)     # (3L+2, 128, 128)
    EB_slab = jnp.asarray(np.stack(EB_list), jnp.float32)    # (L, Ep, 128)
    B_slab = jnp.asarray(np.stack(B_list), jnp.float32)      # (L+2, 1, 128)

    h0_pad = jnp.asarray(pad2(h0, rows=Np, cols=LANES), jnp.float32)     # (Np, 128)

    # dense gather / mean-aggregation matrices (bf16 MXU operands); padded rows/cols are zero
    src_np = np.asarray(src)
    dst_np = np.asarray(dst)
    S = np.zeros((Ep, Np), np.float32)
    S[np.arange(E), src_np] = 1.0                            # S[e, src(e)] = 1
    D = np.zeros((Np, Ep), np.float32)
    D[dst_np, np.arange(E)] = 1.0                            # D[v, e] = 1 iff dst(e) = v
    indeg = D.sum(axis=1, keepdims=True)
    A = D / np.maximum(indeg, 1.0)                           # mean over in-edges (0 if no in-edges)

    return (h0_pad, jnp.asarray(S, jnp.bfloat16), jnp.asarray(A, jnp.bfloat16),
            W_slab, EB_slab, B_slab, Np)


def qgnn_forward(h0, w_e, src, dst, N, params):
    num_classes = int(np.asarray(params["l2_w"]).shape[0])
    h0_pad, S, A, W_slab, EB_slab, B_slab, Np = pack_inputs(h0, w_e, src, dst, N, params)

    kernel = make_qgnn_kernel(NUM_LAYERS)
    # TODO(synk): on v7x, batch multiple graphs along a leading grid axis marked
    #             dimension_semantics=("parallel",) to use both TensorCores; a single
    #             tiny graph has no useful parallel grid axis.
    # TODO(synk): at larger N/E, replace the dense S/A matrices with scalar-prefetched
    #             src/dst index arrays (SMEM) + row gather / segment-mean and tile edges
    #             over a grid axis to avoid O(N*E) VMEM and MXU work.
    out = pl.pallas_call(
        kernel,
        out_shape=jax.ShapeDtypeStruct((Np, LANES), jnp.float32),   # lane-dense output
        in_specs=[pl.BlockSpec(memory_space=pltpu.MemorySpace.VMEM)] * 6,
        out_specs=pl.BlockSpec(memory_space=pltpu.MemorySpace.VMEM),
    )(h0_pad, S, A, W_slab, EB_slab, B_slab)
    return out[:N, :num_classes]


# ----------------------- plain-JAX f32 reference (validation) -----------------------
def qconv_ref(h, w_e, src, dst, N, w1, w2, b2):
    m = jnp.concatenate([h[src], w_e], axis=1)
    tmp = m @ w1.T
    tmp = jnp.where(tmp >= 0, tmp, NEG_SLOPE * tmp)
    sums = jnp.zeros((N, w1.shape[0]), jnp.float32).at[dst].add(tmp)
    cnt = jnp.zeros((N,), jnp.float32).at[dst].add(1.0)
    h_n = sums / jnp.maximum(cnt, 1.0)[:, None]
    h_tot = jnp.concatenate([h, h_n], axis=1)
    return jnp.maximum(h_tot @ w2.T + b2[0], 0.0)


def qgnn_ref(h0, w_e, src, dst, N, params):
    h = h0
    for i in range(1, 6):
        h = qconv_ref(h, w_e, src, dst, N,
                      params[f"c{i}_w1"], params[f"c{i}_w2"], params[f"c{i}_b2"])
    h = jnp.maximum(h @ params["l1_w"].T + params["l1_b"][0], 0.0)
    return h @ params["l2_w"].T + params["l2_b"][0]


# ------------------------------- param / graph setup -------------------------------
def xavier_normal(key, out_dim, in_dim, gain):
    std = gain * np.sqrt(2.0 / (in_dim + out_dim))
    return std * jax.random.normal(key, (out_dim, in_dim), jnp.float32)


if __name__ == "__main__":
    in_feats, h_feats, inter_dim, num_classes = 8, 32, 16, 4
    N, E = 8, 16
    gain = float(np.sqrt(2.0))  # nn.init.calculate_gain('relu')

    key = jax.random.PRNGKey(0)
    keys = iter(jax.random.split(key, 64))

    # graph: node gate types, random edges, edge attributes
    gate_type = jax.random.randint(next(keys), (N,), 0, in_feats)
    src = jax.random.randint(next(keys), (E,), 0, N)
    dst = jax.random.randint(next(keys), (E,), 0, N)
    reversed_flag = jax.random.randint(next(keys), (E,), 0, 2).astype(jnp.float32)

    # embedding(gate_type) and edge feature w = [src_idx, dst_idx, reversed]
    emb_table = jax.random.normal(next(keys), (in_feats, in_feats), jnp.float32)
    h0 = emb_table[gate_type]                                           # (N, in_feats)
    w_e = jnp.stack([src.astype(jnp.float32),
                     dst.astype(jnp.float32),
                     reversed_flag], axis=1)                            # (E, 3)

    # parameters (deterministic xavier-normal init, biases deterministic small values)
    params = {}
    conv_in = [in_feats, h_feats, h_feats, h_feats, h_feats]
    for i in range(1, 6):
        f_in = conv_in[i - 1]
        params[f"c{i}_w1"] = xavier_normal(next(keys), inter_dim, f_in + 3, gain)
        params[f"c{i}_w2"] = xavier_normal(next(keys), h_feats, f_in + inter_dim, gain)
        params[f"c{i}_b2"] = 0.01 * jax.random.normal(next(keys), (1, h_feats), jnp.float32)
    params["l1_w"] = xavier_normal(next(keys), h_feats, h_feats, gain)
    params["l1_b"] = 0.01 * jax.random.normal(next(keys), (1, h_feats), jnp.float32)
    params["l2_w"] = xavier_normal(next(keys), num_classes, h_feats, gain)
    params["l2_b"] = 0.01 * jax.random.normal(next(keys), (1, num_classes), jnp.float32)

    out = jax.block_until_ready(qgnn_forward(h0, w_e, src, dst, N, params))
    ref = jax.block_until_ready(qgnn_ref(h0, w_e, src, dst, N, params))

    assert out.shape == (N, num_classes)
    # bf16 matmul operands (f32 accumulation) across 7 stacked layers -> looser tolerance
    # than the previous all-f32 kernel.
    err = float(np.max(np.abs(np.asarray(out) - np.asarray(ref))))
    assert np.allclose(np.asarray(out), np.asarray(ref), rtol=1e-1, atol=1e-1), (
        f"max abs diff {err}")

    print("KERNEL_OK")
</pallas_src>

<mosaic_0001>
module attributes {stable_mosaic.version = 11 : i64} {
  func.func @kernel(%arg0: memref<16x128xf32, #tpu.memory_space<vmem>>, %arg1: memref<16x16xbf16, #tpu.memory_space<vmem>>, %arg2: memref<16x16xbf16, #tpu.memory_space<vmem>>, %arg3: memref<17x128x128xbf16, #tpu.memory_space<vmem>>, %arg4: memref<5x16x128xf32, #tpu.memory_space<vmem>>, %arg5: memref<7x1x128xf32, #tpu.memory_space<vmem>>, %arg6: memref<16x128xf32, #tpu.memory_space<vmem>>) attributes {dimension_semantics = [], scalar_prefetch = 0 : i64, scratch_operands = 0 : i64, tpu.core_type = #tpu.core_type<tc>} {
    %c0 = arith.constant 0 : index
    %c0_0 = arith.constant 0 : index
    %0 = vector.load %arg1[%c0, %c0_0] : memref<16x16xbf16, #tpu.memory_space<vmem>>, vector<16x16xbf16>
    %c0_1 = arith.constant 0 : index
    %c0_2 = arith.constant 0 : index
    %1 = vector.load %arg2[%c0_1, %c0_2] : memref<16x16xbf16, #tpu.memory_space<vmem>>, vector<16x16xbf16>
    %c0_3 = arith.constant 0 : index
    %c0_4 = arith.constant 0 : index
    %2 = vector.load %arg0[%c0_3, %c0_4] : memref<16x128xf32, #tpu.memory_space<vmem>>, vector<16x128xf32>
    %3 = arith.truncf %2 : vector<16x128xf32> to vector<16x128xbf16>
    %c0_5 = arith.constant 0 : index
    %c0_6 = arith.constant 0 : index
    %c0_7 = arith.constant 0 : index
    %4 = vector.load %arg3[%c0_5, %c0_6, %c0_7] : memref<17x128x128xbf16, #tpu.memory_space<vmem>>, vector<1x128x128xbf16>
    %5 = vector.shape_cast %4 : vector<1x128x128xbf16> to vector<128x128xbf16>
    %c1 = arith.constant 1 : index
    %c0_8 = arith.constant 0 : index
    %c0_9 = arith.constant 0 : index
    %6 = vector.load %arg3[%c1, %c0_8, %c0_9] : memref<17x128x128xbf16, #tpu.memory_space<vmem>>, vector<1x128x128xbf16>
    %7 = vector.shape_cast %6 : vector<1x128x128xbf16> to vector<128x128xbf16>
    %c2 = arith.constant 2 : index
    %c0_10 = arith.constant 0 : index
    %c0_11 = arith.constant 0 : index
    %8 = vector.load %arg3[%c2, %c0_10, %c0_11] : memref<17x128x128xbf16, #tpu.memory_space<vmem>>, vector<1x128x128xbf16>
    %9 = vector.shape_cast %8 : vector<1x128x128xbf16> to vector<128x128xbf16>
    %cst = arith.constant dense<0.000000e+00> : vector<16x128xf32>
    %10 = tpu.matmul %3, %5, %cst {dimension_numbers = #tpu.dot_dimension_numbers<[1], [0], [0], [1], [0, 0, 1, 1], [], []>} : vector<16x128xbf16>, vector<128x128xbf16>, vector<16x128xf32> -> vector<16x128xf32>
    %11 = arith.truncf %10 : vector<16x128xf32> to vector<16x128xbf16>
    %cst_12 = arith.constant dense<0.000000e+00> : vector<16x128xf32>
    %12 = tpu.matmul %0, %11, %cst_12 {dimension_numbers = #tpu.dot_dimension_numbers<[1], [0], [0], [1], [0, 0, 1, 1], [], []>} : vector<16x16xbf16>, vector<16x128xbf16>, vector<16x128xf32> -> vector<16x128xf32>
    %c0_13 = arith.constant 0 : index
    %c0_14 = arith.constant 0 : index
    %c0_15 = arith.constant 0 : index
    %13 = vector.load %arg4[%c0_13, %c0_14, %c0_15] : memref<5x16x128xf32, #tpu.memory_space<vmem>>, vector<1x16x128xf32>
    %14 = vector.shape_cast %13 : vector<1x16x128xf32> to vector<16x128xf32>
    %15 = arith.addf %12, %14 : vector<16x128xf32>
    %cst_16 = arith.constant 0.000000e+00 : f32
    %16 = vector.broadcast %cst_16 : f32 to vector<16x128xf32>
    %17 = arith.cmpf oge, %15, %16 : vector<16x128xf32>
    %cst_17 = arith.constant 0.00999999977 : f32
    %18 = vector.broadcast %cst_17 : f32 to vector<16x128xf32>
    %19 = arith.mulf %18, %15 : vector<16x128xf32>
    %20 = arith.select %17, %15, %19 : vector<16x128xi1>, vector<16x128xf32>
    %21 = arith.truncf %20 : vector<16x128xf32> to vector<16x128xbf16>
    %cst_18 = arith.constant dense<0.000000e+00> : vector<16x128xf32>
    %22 = tpu.matmul %1, %21, %cst_18 {dimension_numbers = #tpu.dot_dimension_numbers<[1], [0], [0], [1], [0, 0, 1, 1], [], []>} : vector<16x16xbf16>, vector<16x128xbf16>, vector<16x128xf32> -> vector<16x128xf32>
    %cst_19 = arith.constant dense<0.000000e+00> : vector<16x128xf32>
    %23 = tpu.matmul %3, %7, %cst_19 {dimension_numbers = #tpu.dot_dimension_numbers<[1], [0], [0], [1], [0, 0, 1, 1], [], []>} : vector<16x128xbf16>, vector<128x128xbf16>, vector<16x128xf32> -> vector<16x128xf32>
    %24 = arith.truncf %22 : vector<16x128xf32> to vector<16x128xbf16>
    %cst_20 = arith.constant dense<0.000000e+00> : vector<16x128xf32>
    %25 = tpu.matmul %24, %9, %cst_20 {dimension_numbers = #tpu.dot_dimension_numbers<[1], [0], [0], [1], [0, 0, 1, 1], [], []>} : vector<16x128xbf16>, vector<128x128xbf16>, vector<16x128xf32> -> vector<16x128xf32>
    %26 = arith.addf %23, %25 : vector<16x128xf32>
    %c0_21 = arith.constant 0 : index
    %c0_22 = arith.constant 0 : index
    %c0_23 = arith.constant 0 : index
    %27 = vector.load %arg5[%c0_21, %c0_22, %c0_23] : memref<7x1x128xf32, #tpu.memory_space<vmem>>, vector<1x1x128xf32>
    %28 = vector.shape_cast %27 : vector<1x1x128xf32> to vector<1x128xf32>
    %29 = vector.broadcast %28 : vector<1x128xf32> to vector<16x128xf32>
    %30 = arith.addf %26, %29 : vector<16x128xf32>
    %cst_24 = arith.constant 0.000000e+00 : f32
    %31 = vector.broadcast %cst_24 : f32 to vector<16x128xf32>
    %32 = arith.maximumf %30, %31 : vector<16x128xf32>
    %33 = arith.truncf %32 : vector<16x128xf32> to vector<16x128xbf16>
    %c3 = arith.constant 3 : index
    %c0_25 = arith.constant 0 : index
    %c0_26 = arith.constant 0 : index
    %34 = vector.load %arg3[%c3, %c0_25, %c0_26] : memref<17x128x128xbf16, #tpu.memory_space<vmem>>, vector<1x128x128xbf16>
    %35 = vector.shape_cast %34 : vector<1x128x128xbf16> to vector<128x128xbf16>
    %c4 = arith.constant 4 : index
    %c0_27 = arith.constant 0 : index
    %c0_28 = arith.constant 0 : index
    %36 = vector.load %arg3[%c4, %c0_27, %c0_28] : memref<17x128x128xbf16, #tpu.memory_space<vmem>>, vector<1x128x128xbf16>
    %37 = vector.shape_cast %36 : vector<1x128x128xbf16> to vector<128x128xbf16>
    %c5 = arith.constant 5 : index
    %c0_29 = arith.constant 0 : index
    %c0_30 = arith.constant 0 : index
    %38 = vector.load %arg3[%c5, %c0_29, %c0_30] : memref<17x128x128xbf16, #tpu.memory_space<vmem>>, vector<1x128x128xbf16>
    %39 = vector.shape_cast %38 : vector<1x128x128xbf16> to vector<128x128xbf16>
    %cst_31 = arith.constant dense<0.000000e+00> : vector<16x128xf32>
    %40 = tpu.matmul %33, %35, %cst_31 {dimension_numbers = #tpu.dot_dimension_numbers<[1], [0], [0], [1], [0, 0, 1, 1], [], []>} : vector<16x128xbf16>, vector<128x128xbf16>, vector<16x128xf32> -> vector<16x128xf32>
    %41 = arith.truncf %40 : vector<16x128xf32> to vector<16x128xbf16>
    %cst_32 = arith.constant dense<0.000000e+00> : vector<16x128xf32>
    %42 = tpu.matmul %0, %41, %cst_32 {dimension_numbers = #tpu.dot_dimension_numbers<[1], [0], [0], [1], [0, 0, 1, 1], [], []>} : vector<16x16xbf16>, vector<16x128xbf16>, vector<16x128xf32> -> vector<16x128xf32>
    %c1_33 = arith.constant 1 : index
    %c0_34 = arith.constant 0 : index
    %c0_35 = arith.constant 0 : index
    %43 = vector.load %arg4[%c1_33, %c0_34, %c0_35] : memref<5x16x128xf32, #tpu.memory_space<vmem>>, vector<1x16x128xf32>
    %44 = vector.shape_cast %43 : vector<1x16x128xf32> to vector<16x128xf32>
    %45 = arith.addf %42, %44 : vector<16x128xf32>
    %cst_36 = arith.constant 0.000000e+00 : f32
    %46 = vector.broadcast %cst_36 : f32 to vector<16x128xf32>
    %47 = arith.cmpf oge, %45, %46 : vector<16x128xf32>
    %cst_37 = arith.constant 0.00999999977 : f32
    %48 = vector.broadcast %cst_37 : f32 to vector<16x128xf32>
    %49 = arith.mulf %48, %45 : vector<16x128xf32>
    %50 = arith.select %47, %45, %49 : vector<16x128xi1>, vector<16x128xf32>
    %51 = arith.truncf %50 : vector<16x128xf32> to vector<16x128xbf16>
    %cst_38 = arith.constant dense<0.000000e+00> : vector<16x128xf32>
    %52 = tpu.matmul %1, %51, %cst_38 {dimension_numbers = #tpu.dot_dimension_numbers<[1], [0], [0], [1], [0, 0, 1, 1], [], []>} : vector<16x16xbf16>, vector<16x128xbf16>, vector<16x128xf32> -> vector<16x128xf32>
    %cst_39 = arith.constant dense<0.000000e+00> : vector<16x128xf32>
    %53 = tpu.matmul %33, %37, %cst_39 {dimension_numbers = #tpu.dot_dimension_numbers<[1], [0], [0], [1], [0, 0, 1, 1], [], []>} : vector<16x128xbf16>, vector<128x128xbf16>, vector<16x128xf32> -> vector<16x128xf32>
    %54 = arith.truncf %52 : vector<16x128xf32> to vector<16x128xbf16>
    %cst_40 = arith.constant dense<0.000000e+00> : vector<16x128xf32>
    %55 = tpu.matmul %54, %39, %cst_40 {dimension_numbers = #tpu.dot_dimension_numbers<[1], [0], [0], [1], [0, 0, 1, 1], [], []>} : vector<16x128xbf16>, vector<128x128xbf16>, vector<16x128xf32> -> vector<16x128xf32>
    %56 = arith.addf %53, %55 : vector<16x128xf32>
    %c1_41 = arith.constant 1 : index
    %c0_42 = arith.constant 0 : index
    %c0_43 = arith.constant 0 : index
    %57 = vector.load %arg5[%c1_41, %c0_42, %c0_43] : memref<7x1x128xf32, #tpu.memory_space<vmem>>, vector<1x1x128xf32>
    %58 = vector.shape_cast %57 : vector<1x1x128xf32> to vector<1x128xf32>
    %59 = vector.broadcast %58 : vector<1x128xf32> to vector<16x128xf32>
    %60 = arith.addf %56, %59 : vector<16x128xf32>
    %cst_44 = arith.constant 0.000000e+00 : f32
    %61 = vector.broadcast %cst_44 : f32 to vector<16x128xf32>
    %62 = arith.maximumf %60, %61 : vector<16x128xf32>
    %63 = arith.truncf %62 : vector<16x128xf32> to vector<16x128xbf16>
    %c6 = arith.constant 6 : index
    %c0_45 = arith.constant 0 : index
    %c0_46 = arith.constant 0 : index
    %64 = vector.load %arg3[%c6, %c0_45, %c0_46] : memref<17x128x128xbf16, #tpu.memory_space<vmem>>, vector<1x128x128xbf16>
    %65 = vector.shape_cast %64 : vector<1x128x128xbf16> to vector<128x128xbf16>
    %c7 = arith.constant 7 : index
    %c0_47 = arith.constant 0 : index
    %c0_48 = arith.constant 0 : index
    %66 = vector.load %arg3[%c7, %c0_47, %c0_48] : memref<17x128x128xbf16, #tpu.memory_space<vmem>>, vector<1x128x128xbf16>
    %67 = vector.shape_cast %66 : vector<1x128x128xbf16> to vector<128x128xbf16>
    %c8 = arith.constant 8 : index
    %c0_49 = arith.constant 0 : index
    %c0_50 = arith.constant 0 : index
    %68 = vector.load %arg3[%c8, %c0_49, %c0_50] : memref<17x128x128xbf16, #tpu.memory_space<vmem>>, vector<1x128x128xbf16>
    %69 = vector.shape_cast %68 : vector<1x128x128xbf16> to vector<128x128xbf16>
    %cst_51 = arith.constant dense<0.000000e+00> : vector<16x128xf32>
    %70 = tpu.matmul %63, %65, %cst_51 {dimension_numbers = #tpu.dot_dimension_numbers<[1], [0], [0], [1], [0, 0, 1, 1], [], []>} : vector<16x128xbf16>, vector<128x128xbf16>, vector<16x128xf32> -> vector<16x128xf32>
    %71 = arith.truncf %70 : vector<16x128xf32> to vector<16x128xbf16>
    %cst_52 = arith.constant dense<0.000000e+00> : vector<16x128xf32>
    %72 = tpu.matmul %0, %71, %cst_52 {dimension_numbers = #tpu.dot_dimension_numbers<[1], [0], [0], [1], [0, 0, 1, 1], [], []>} : vector<16x16xbf16>, vector<16x128xbf16>, vector<16x128xf32> -> vector<16x128xf32>
    %c2_53 = arith.constant 2 : index
    %c0_54 = arith.constant 0 : index
    %c0_55 = arith.constant 0 : index
    %73 = vector.load %arg4[%c2_53, %c0_54, %c0_55] : memref<5x16x128xf32, #tpu.memory_space<vmem>>, vector<1x16x128xf32>
    %74 = vector.shape_cast %73 : vector<1x16x128xf32> to vector<16x128xf32>
    %75 = arith.addf %72, %74 : vector<16x128xf32>
    %cst_56 = arith.constant 0.000000e+00 : f32
    %76 = vector.broadcast %cst_56 : f32 to vector<16x128xf32>
    %77 = arith.cmpf oge, %75, %76 : vector<16x128xf32>
    %cst_57 = arith.constant 0.00999999977 : f32
    %78 = vector.broadcast %cst_57 : f32 to vector<16x128xf32>
    %79 = arith.mulf %78, %75 : vector<16x128xf32>
    %80 = arith.select %77, %75, %79 : vector<16x128xi1>, vector<16x128xf32>
    %81 = arith.truncf %80 : vector<16x128xf32> to vector<16x128xbf16>
    %cst_58 = arith.constant dense<0.000000e+00> : vector<16x128xf32>
    %82 = tpu.matmul %1, %81, %cst_58 {dimension_numbers = #tpu.dot_dimension_numbers<[1], [0], [0], [1], [0, 0, 1, 1], [], []>} : vector<16x16xbf16>, vector<16x128xbf16>, vector<16x128xf32> -> vector<16x128xf32>
    %cst_59 = arith.constant dense<0.000000e+00> : vector<16x128xf32>
    %83 = tpu.matmul %63, %67, %cst_59 {dimension_numbers = #tpu.dot_dimension_numbers<[1], [0], [0], [1], [0, 0, 1, 1], [], []>} : vector<16x128xbf16>, vector<128x128xbf16>, vector<16x128xf32> -> vector<16x128xf32>
    %84 = arith.truncf %82 : vector<16x128xf32> to vector<16x128xbf16>
    %cst_60 = arith.constant dense<0.000000e+00> : vector<16x128xf32>
    %85 = tpu.matmul %84, %69, %cst_60 {dimension_numbers = #tpu.dot_dimension_numbers<[1], [0], [0], [1], [0, 0, 1, 1], [], []>} : vector<16x128xbf16>, vector<128x128xbf16>, vector<16x128xf32> -> vector<16x128xf32>
    %86 = arith.addf %83, %85 : vector<16x128xf32>
    %c2_61 = arith.constant 2 : index
    %c0_62 = arith.constant 0 : index
    %c0_63 = arith.constant 0 : index
    %87 = vector.load %arg5[%c2_61, %c0_62, %c0_63] : memref<7x1x128xf32, #tpu.memory_space<vmem>>, vector<1x1x128xf32>
    %88 = vector.shape_cast %87 : vector<1x1x128xf32> to vector<1x128xf32>
    %89 = vector.broadcast %88 : vector<1x128xf32> to vector<16x128xf32>
    %90 = arith.addf %86, %89 : vector<16x128xf32>
    %cst_64 = arith.constant 0.000000e+00 : f32
    %91 = vector.broadcast %cst_64 : f32 to vector<16x128xf32>
    %92 = arith.maximumf %90, %91 : vector<16x128xf32>
    %93 = arith.truncf %92 : vector<16x128xf32> to vector<16x128xbf16>
    %c9 = arith.constant 9 : index
    %c0_65 = arith.constant 0 : index
    %c0_66 = arith.constant 0 : index
    %94 = vector.load %arg3[%c9, %c0_65, %c0_66] : memref<17x128x128xbf16, #tpu.memory_space<vmem>>, vector<1x128x128xbf16>
    %95 = vector.shape_cast %94 : vector<1x128x128xbf16> to vector<128x128xbf16>
    %c10 = arith.constant 10 : index
    %c0_67 = arith.constant 0 : index
    %c0_68 = arith.constant 0 : index
    %96 = vector.load %arg3[%c10, %c0_67, %c0_68] : memref<17x128x128xbf16, #tpu.memory_space<vmem>>, vector<1x128x128xbf16>
    %97 = vector.shape_cast %96 : vector<1x128x128xbf16> to vector<128x128xbf16>
    %c11 = arith.constant 11 : index
    %c0_69 = arith.constant 0 : index
    %c0_70 = arith.constant 0 : index
    %98 = vector.load %arg3[%c11, %c0_69, %c0_70] : memref<17x128x128xbf16, #tpu.memory_space<vmem>>, vector<1x128x128xbf16>
    %99 = vector.shape_cast %98 : vector<1x128x128xbf16> to vector<128x128xbf16>
    %cst_71 = arith.constant dense<0.000000e+00> : vector<16x128xf32>
    %100 = tpu.matmul %93, %95, %cst_71 {dimension_numbers = #tpu.dot_dimension_numbers<[1], [0], [0], [1], [0, 0, 1, 1], [], []>} : vector<16x128xbf16>, vector<128x128xbf16>, vector<16x128xf32> -> vector<16x128xf32>
    %101 = arith.truncf %100 : vector<16x128xf32> to vector<16x128xbf16>
    %cst_72 = arith.constant dense<0.000000e+00> : vector<16x128xf32>
    %102 = tpu.matmul %0, %101, %cst_72 {dimension_numbers = #tpu.dot_dimension_numbers<[1], [0], [0], [1], [0, 0, 1, 1], [], []>} : vector<16x16xbf16>, vector<16x128xbf16>, vector<16x128xf32> -> vector<16x128xf32>
    %c3_73 = arith.constant 3 : index
    %c0_74 = arith.constant 0 : index
    %c0_75 = arith.constant 0 : index
    %103 = vector.load %arg4[%c3_73, %c0_74, %c0_75] : memref<5x16x128xf32, #tpu.memory_space<vmem>>, vector<1x16x128xf32>
    %104 = vector.shape_cast %103 : vector<1x16x128xf32> to vector<16x128xf32>
    %105 = arith.addf %102, %104 : vector<16x128xf32>
    %cst_76 = arith.constant 0.000000e+00 : f32
    %106 = vector.broadcast %cst_76 : f32 to vector<16x128xf32>
    %107 = arith.cmpf oge, %105, %106 : vector<16x128xf32>
    %cst_77 = arith.constant 0.00999999977 : f32
    %108 = vector.broadcast %cst_77 : f32 to vector<16x128xf32>
    %109 = arith.mulf %108, %105 : vector<16x128xf32>
    %110 = arith.select %107, %105, %109 : vector<16x128xi1>, vector<16x128xf32>
    %111 = arith.truncf %110 : vector<16x128xf32> to vector<16x128xbf16>
    %cst_78 = arith.constant dense<0.000000e+00> : vector<16x128xf32>
    %112 = tpu.matmul %1, %111, %cst_78 {dimension_numbers = #tpu.dot_dimension_numbers<[1], [0], [0], [1], [0, 0, 1, 1], [], []>} : vector<16x16xbf16>, vector<16x128xbf16>, vector<16x128xf32> -> vector<16x128xf32>
    %cst_79 = arith.constant dense<0.000000e+00> : vector<16x128xf32>
    %113 = tpu.matmul %93, %97, %cst_79 {dimension_numbers = #tpu.dot_dimension_numbers<[1], [0], [0], [1], [0, 0, 1, 1], [], []>} : vector<16x128xbf16>, vector<128x128xbf16>, vector<16x128xf32> -> vector<16x128xf32>
    %114 = arith.truncf %112 : vector<16x128xf32> to vector<16x128xbf16>
    %cst_80 = arith.constant dense<0.000000e+00> : vector<16x128xf32>
    %115 = tpu.matmul %114, %99, %cst_80 {dimension_numbers = #tpu.dot_dimension_numbers<[1], [0], [0], [1], [0, 0, 1, 1], [], []>} : vector<16x128xbf16>, vector<128x128xbf16>, vector<16x128xf32> -> vector<16x128xf32>
    %116 = arith.addf %113, %115 : vector<16x128xf32>
    %c3_81 = arith.constant 3 : index
    %c0_82 = arith.constant 0 : index
    %c0_83 = arith.constant 0 : index
    %117 = vector.load %arg5[%c3_81, %c0_82, %c0_83] : memref<7x1x128xf32, #tpu.memory_space<vmem>>, vector<1x1x128xf32>
    %118 = vector.shape_cast %117 : vector<1x1x128xf32> to vector<1x128xf32>
    %119 = vector.broadcast %118 : vector<1x128xf32> to vector<16x128xf32>
    %120 = arith.addf %116, %119 : vector<16x128xf32>
    %cst_84 = arith.constant 0.000000e+00 : f32
    %121 = vector.broadcast %cst_84 : f32 to vector<16x128xf32>
    %122 = arith.maximumf %120, %121 : vector<16x128xf32>
    %123 = arith.truncf %122 : vector<16x128xf32> to vector<16x128xbf16>
    %c12 = arith.constant 12 : index
    %c0_85 = arith.constant 0 : index
    %c0_86 = arith.constant 0 : index
    %124 = vector.load %arg3[%c12, %c0_85, %c0_86] : memref<17x128x128xbf16, #tpu.memory_space<vmem>>, vector<1x128x128xbf16>
    %125 = vector.shape_cast %124 : vector<1x128x128xbf16> to vector<128x128xbf16>
    %c13 = arith.constant 13 : index
    %c0_87 = arith.constant 0 : index
    %c0_88 = arith.constant 0 : index
    %126 = vector.load %arg3[%c13, %c0_87, %c0_88] : memref<17x128x128xbf16, #tpu.memory_space<vmem>>, vector<1x128x128xbf16>
    %127 = vector.shape_cast %126 : vector<1x128x128xbf16> to vector<128x128xbf16>
    %c14 = arith.constant 14 : index
    %c0_89 = arith.constant 0 : index
    %c0_90 = arith.constant 0 : index
    %128 = vector.load %arg3[%c14, %c0_89, %c0_90] : memref<17x128x128xbf16, #tpu.memory_space<vmem>>, vector<1x128x128xbf16>
    %129 = vector.shape_cast %128 : vector<1x128x128xbf16> to vector<128x128xbf16>
    %cst_91 = arith.constant dense<0.000000e+00> : vector<16x128xf32>
    %130 = tpu.matmul %123, %125, %cst_91 {dimension_numbers = #tpu.dot_dimension_numbers<[1], [0], [0], [1], [0, 0, 1, 1], [], []>} : vector<16x128xbf16>, vector<128x128xbf16>, vector<16x128xf32> -> vector<16x128xf32>
    %131 = arith.truncf %130 : vector<16x128xf32> to vector<16x128xbf16>
    %cst_92 = arith.constant dense<0.000000e+00> : vector<16x128xf32>
    %132 = tpu.matmul %0, %131, %cst_92 {dimension_numbers = #tpu.dot_dimension_numbers<[1], [0], [0], [1], [0, 0, 1, 1], [], []>} : vector<16x16xbf16>, vector<16x128xbf16>, vector<16x128xf32> -> vector<16x128xf32>
    %c4_93 = arith.constant 4 : index
    %c0_94 = arith.constant 0 : index
    %c0_95 = arith.constant 0 : index
    %133 = vector.load %arg4[%c4_93, %c0_94, %c0_95] : memref<5x16x128xf32, #tpu.memory_space<vmem>>, vector<1x16x128xf32>
    %134 = vector.shape_cast %133 : vector<1x16x128xf32> to vector<16x128xf32>
    %135 = arith.addf %132, %134 : vector<16x128xf32>
    %cst_96 = arith.constant 0.000000e+00 : f32
    %136 = vector.broadcast %cst_96 : f32 to vector<16x128xf32>
    %137 = arith.cmpf oge, %135, %136 : vector<16x128xf32>
    %cst_97 = arith.constant 0.00999999977 : f32
    %138 = vector.broadcast %cst_97 : f32 to vector<16x128xf32>
    %139 = arith.mulf %138, %135 : vector<16x128xf32>
    %140 = arith.select %137, %135, %139 : vector<16x128xi1>, vector<16x128xf32>
    %141 = arith.truncf %140 : vector<16x128xf32> to vector<16x128xbf16>
    %cst_98 = arith.constant dense<0.000000e+00> : vector<16x128xf32>
    %142 = tpu.matmul %1, %141, %cst_98 {dimension_numbers = #tpu.dot_dimension_numbers<[1], [0], [0], [1], [0, 0, 1, 1], [], []>} : vector<16x16xbf16>, vector<16x128xbf16>, vector<16x128xf32> -> vector<16x128xf32>
    %cst_99 = arith.constant dense<0.000000e+00> : vector<16x128xf32>
    %143 = tpu.matmul %123, %127, %cst_99 {dimension_numbers = #tpu.dot_dimension_numbers<[1], [0], [0], [1], [0, 0, 1, 1], [], []>} : vector<16x128xbf16>, vector<128x128xbf16>, vector<16x128xf32> -> vector<16x128xf32>
    %144 = arith.truncf %142 : vector<16x128xf32> to vector<16x128xbf16>
    %cst_100 = arith.constant dense<0.000000e+00> : vector<16x128xf32>
    %145 = tpu.matmul %144, %129, %cst_100 {dimension_numbers = #tpu.dot_dimension_numbers<[1], [0], [0], [1], [0, 0, 1, 1], [], []>} : vector<16x128xbf16>, vector<128x128xbf16>, vector<16x128xf32> -> vector<16x128xf32>
    %146 = arith.addf %143, %145 : vector<16x128xf32>
    %c4_101 = arith.constant 4 : index
    %c0_102 = arith.constant 0 : index
    %c0_103 = arith.constant 0 : index
    %147 = vector.load %arg5[%c4_101, %c0_102, %c0_103] : memref<7x1x128xf32, #tpu.memory_space<vmem>>, vector<1x1x128xf32>
    %148 = vector.shape_cast %147 : vector<1x1x128xf32> to vector<1x128xf32>
    %149 = vector.broadcast %148 : vector<1x128xf32> to vector<16x128xf32>
    %150 = arith.addf %146, %149 : vector<16x128xf32>
    %cst_104 = arith.constant 0.000000e+00 : f32
    %151 = vector.broadcast %cst_104 : f32 to vector<16x128xf32>
    %152 = arith.maximumf %150, %151 : vector<16x128xf32>
    %153 = arith.truncf %152 : vector<16x128xf32> to vector<16x128xbf16>
    %c15 = arith.constant 15 : index
    %c0_105 = arith.constant 0 : index
    %c0_106 = arith.constant 0 : index
    %154 = vector.load %arg3[%c15, %c0_105, %c0_106] : memref<17x128x128xbf16, #tpu.memory_space<vmem>>, vector<1x128x128xbf16>
    %155 = vector.shape_cast %154 : vector<1x128x128xbf16> to vector<128x128xbf16>
    %cst_107 = arith.constant dense<0.000000e+00> : vector<16x128xf32>
    %156 = tpu.matmul %153, %155, %cst_107 {dimension_numbers = #tpu.dot_dimension_numbers<[1], [0], [0], [1], [0, 0, 1, 1], [], []>} : vector<16x128xbf16>, vector<128x128xbf16>, vector<16x128xf32> -> vector<16x128xf32>
    %c5_108 = arith.constant 5 : index
    %c0_109 = arith.constant 0 : index
    %c0_110 = arith.constant 0 : index
    %157 = vector.load %arg5[%c5_108, %c0_109, %c0_110] : memref<7x1x128xf32, #tpu.memory_space<vmem>>, vector<1x1x128xf32>
    %158 = vector.shape_cast %157 : vector<1x1x128xf32> to vector<1x128xf32>
    %159 = vector.broadcast %158 : vector<1x128xf32> to vector<16x128xf32>
    %160 = arith.addf %156, %159 : vector<16x128xf32>
    %cst_111 = arith.constant 0.000000e+00 : f32
    %161 = vector.broadcast %cst_111 : f32 to vector<16x128xf32>
    %162 = arith.maximumf %160, %161 : vector<16x128xf32>
    %163 = arith.truncf %162 : vector<16x128xf32> to vector<16x128xbf16>
    %c16 = arith.constant 16 : index
    %c0_112 = arith.constant 0 : index
    %c0_113 = arith.constant 0 : index
    %164 = vector.load %arg3[%c16, %c0_112, %c0_113] : memref<17x128x128xbf16, #tpu.memory_space<vmem>>, vector<1x128x128xbf16>
    %165 = vector.shape_cast %164 : vector<1x128x128xbf16> to vector<128x128xbf16>
    %cst_114 = arith.constant dense<0.000000e+00> : vector<16x128xf32>
    %166 = tpu.matmul %163, %165, %cst_114 {dimension_numbers = #tpu.dot_dimension_numbers<[1], [0], [0], [1], [0, 0, 1, 1], [], []>} : vector<16x128xbf16>, vector<128x128xbf16>, vector<16x128xf32> -> vector<16x128xf32>
    %c6_115 = arith.constant 6 : index
    %c0_116 = arith.constant 0 : index
    %c0_117 = arith.constant 0 : index
    %167 = vector.load %arg5[%c6_115, %c0_116, %c0_117] : memref<7x1x128xf32, #tpu.memory_space<vmem>>, vector<1x1x128xf32>
    %168 = vector.shape_cast %167 : vector<1x1x128xf32> to vector<1x128xf32>
    %169 = vector.broadcast %168 : vector<1x128xf32> to vector<16x128xf32>
    %170 = arith.addf %166, %169 : vector<16x128xf32>
    %c0_118 = arith.constant 0 : index
    %c0_119 = arith.constant 0 : index
    %171 = vector.load %arg6[%c0_118, %c0_119] : memref<16x128xf32, #tpu.memory_space<vmem>>, vector<16x128xf32>
    tpu.vector_store %arg6[%c0_118, %c0_119], %170 {strides = array<i32>} : memref<16x128xf32, #tpu.memory_space<vmem>>, vector<16x128xf32>,
    return
  }
}

</mosaic_0001>

<llo_original>
// kernel: tpu_custom_call.1
$region0: #{tpu_custom_call.1}
  #allocation0 [shape = 'u32[]', space=smem, size = 0x4, offset = 0x4, fixed_abs, tag = 'smem constant byte address 0x4 - core index']
  #allocation1 [shape = 'u32[144,128]{1,0:T(1,128)}', space=vmem, size = 0x12000, scoped, tag = 'internal scratch']
  %s0 = inlined_call_operand.hbm [shape: f32[16,128], index: 0, kind: input, shape index: {}]
  %s1 = inlined_call_operand.hbm [shape: bf16[16,16], index: 1, kind: input, shape index: {}]
  %s2 = inlined_call_operand.hbm [shape: bf16[16,16], index: 2, kind: input, shape index: {}]
  %s3 = inlined_call_operand.hbm [shape: bf16[17,128,128], index: 3, kind: input, shape index: {}]
  %s4 = inlined_call_operand.hbm [shape: f32[5,16,128], index: 4, kind: input, shape index: {}]
  %s5 = inlined_call_operand.vmem [shape: f32[7,1,128], index: 5, kind: input, shape index: {}]
  %s6 = inlined_call_operand.hbm [shape: f32[16,128], index: 6, kind: output, shape index: {}]
  %s7 = sld [smem:[#allocation0]]
  $region54: #{tpu_custom_call.1} parent=0
    _
  %s9 = ssub.s32 1, %s7
  %s10 = scalar_select 0, %s9, %s7
  $region1: #{tpu_custom_call.1} parent=0
    #allocation2 [shape = 'u8[8192]{0}', space=vmem, size = 0x2000, scoped, tag = 'input window, operand 0, single buffered']
    #allocation3 [shape = 's32[1]{0}', space=sflag, size = 0x4, scoped, tag = 'scoped memory for tpu_custom_call.1']
    #allocation4 [shape = 's32[1]{0}', space=sflag, size = 0x4, scoped, tag = 'scoped memory for tpu_custom_call.1']
    #allocation5 [shape = 'u8[4096]{0}', space=vmem, size = 0x1000, scoped, tag = 'input window, operand 1, single buffered']
    #allocation6 [shape = 's32[1]{0}', space=sflag, size = 0x4, scoped, tag = 'scoped memory for tpu_custom_call.1']
    #allocation7 [shape = 'u8[4096]{0}', space=vmem, size = 0x1000, scoped, tag = 'input window, operand 2, single buffered']
    #allocation8 [shape = 'u8[557056]{0}', space=vmem, size = 0x88000, scoped, tag = 'input window, operand 3, single buffered']
    #allocation9 [shape = 's32[1]{0}', space=sflag, size = 0x4, scoped, tag = 'scoped memory for tpu_custom_call.1']
    #allocation10 [shape = 'u8[40960]{0}', space=vmem, size = 0xa000, scoped, tag = 'input window, operand 4, single buffered']
    #allocation11 [shape = 'u8[8192]{0}', space=vmem, size = 0x2000, scoped, tag = 'output window, operand 0, single buffered']
    %11 = vsyncpa [#allocation3], 0
    %12 = vsyncpa [#allocation6], 0
    %13 = vsyncpa [#allocation9], 0
    %14 = vsyncpa [#allocation4], 0
    // Predicated region
    $region2: #{tpu_custom_call.1} parent=1 // pred_check
      _
    $region3: #{tpu_custom_call.1} parent=1 // pred_check_branch
      %16 = sbr.rel (0) target = $region5
    $region4: #{tpu_custom_call.1} parent=1 // pred_region
      %s18 = ssub.s32 256, 256
      %19 = vsyncadd [#allocation3], %s18
      %s20 = sshll.u32 [#allocation2], 4
      %s21 = int_to_ptr.vmem [resolvable:$true] %s20
      %26 = dma.hbm_to_vmem [thread:$0]  %s0, 256, %s21, [#allocation3], 128, 128, 8
    $region5: #{tpu_custom_call.1} parent=1 // pred_fallthru
      _
    // Predicated region
    $region6: #{tpu_custom_call.1} parent=1 // pred_check
      _
    $region7: #{tpu_custom_call.1} parent=1 // pred_check_branch
      %28 = sbr.rel (0) target = $region9
    $region8: #{tpu_custom_call.1} parent=1 // pred_region
      %s30 = ssub.s32 128, 128
      %31 = vsyncadd [#allocation6], %s30
      %s32 = sshll.u32 [#allocation5], 4
      %s33 = int_to_ptr.vmem [resolvable:$true] %s32
      %38 = dma.hbm_to_vmem [thread:$0]  %s1, 128, %s33, [#allocation6], 64, 64, 4
    $region9: #{tpu_custom_call.1} parent=1 // pred_fallthru
      _
    // Predicated region
    $region10: #{tpu_custom_call.1} parent=1 // pred_check
      _
    $region11: #{tpu_custom_call.1} parent=1 // pred_check_branch
      %40 = sbr.rel (0) target = $region13
    $region12: #{tpu_custom_call.1} parent=1 // pred_region
      %s42 = ssub.s32 128, 128
      %43 = vsyncadd [#allocation6], %s42
      %s44 = sshll.u32 [#allocation7], 4
      %s45 = int_to_ptr.vmem [resolvable:$true] %s44
      %50 = dma.hbm_to_vmem [thread:$0]  %s2, 128, %s45, [#allocation6], 64, 64, 4
    $region13: #{tpu_custom_call.1} parent=1 // pred_fallthru
      _
    // Predicated region
    $region14: #{tpu_custom_call.1} parent=1 // pred_check
      _
    $region15: #{tpu_custom_call.1} parent=1 // pred_check_branch
      %52 = sbr.rel (0) target = $region17
    $region16: #{tpu_custom_call.1} parent=1 // pred_region
      %s54 = ssub.s32 17408, 17408
      %55 = vsyncadd [#allocation9], %s54
      %s56 = sshll.u32 [#allocation8], 4
      %s57 = int_to_ptr.vmem [resolvable:$true] %s56
      %62 = dma.hbm_to_vmem [thread:$0]  %s3, 17408, %s57, [#allocation9], 64, 64, 4
    $region17: #{tpu_custom_call.1} parent=1 // pred_fallthru
      _
    // Predicated region
    $region18: #{tpu_custom_call.1} parent=1 // pred_check
      _
    $region19: #{tpu_custom_call.1} parent=1 // pred_check_branch
      %64 = sbr.rel (0) target = $region21
    $region20: #{tpu_custom_call.1} parent=1 // pred_region
      %s66 = ssub.s32 1280, 1280
      %67 = vsyncadd [#allocation9], %s66
      %s68 = sshll.u32 [#allocation10], 4
      %s69 = int_to_ptr.vmem [resolvable:$true] %s68
      %74 = dma.hbm_to_vmem [thread:$0]  %s4, 1280, %s69, [#allocation9], 128, 128, 8
    $region21: #{tpu_custom_call.1} parent=1 // pred_fallthru
      _
    // Predicated region
    $region22: #{tpu_custom_call.1} parent=1 // pred_check
      _
    $region23: #{tpu_custom_call.1} parent=1 // pred_check_branch
      %76 = sbr.rel (0) target = $region25
    $region24: #{tpu_custom_call.1} parent=1 // pred_region
      _
    $region25: #{tpu_custom_call.1} parent=1 // pred_fallthru
      _
    // Predicated region
    $region26: #{tpu_custom_call.1} parent=1 // pred_check
      _
    $region27: #{tpu_custom_call.1} parent=1 // pred_check_branch
      %78 = sbr.rel (0) target = $region29
    $region28: #{tpu_custom_call.1} parent=1 // pred_region
      %79 = dma.done [#allocation3], 256
    $region29: #{tpu_custom_call.1} parent=1 // pred_fallthru
      _
    // Predicated region
    $region30: #{tpu_custom_call.1} parent=1 // pred_check
      _
    $region31: #{tpu_custom_call.1} parent=1 // pred_check_branch
      %81 = sbr.rel (0) target = $region33
    $region32: #{tpu_custom_call.1} parent=1 // pred_region
      %82 = dma.done [#allocation6], 128
    $region33: #{tpu_custom_call.1} parent=1 // pred_fallthru
      _
    // Predicated region
    $region34: #{tpu_custom_call.1} parent=1 // pred_check
      _
    $region35: #{tpu_custom_call.1} parent=1 // pred_check_branch
      %84 = sbr.rel (0) target = $region37
    $region36: #{tpu_custom_call.1} parent=1 // pred_region
      %85 = dma.done [#allocation6], 128
    $region37: #{tpu_custom_call.1} parent=1 // pred_fallthru
      _
    // Predicated region
    $region38: #{tpu_custom_call.1} parent=1 // pred_check
      _
    $region39: #{tpu_custom_call.1} parent=1 // pred_check_branch
      %87 = sbr.rel (0) target = $region41
    $region40: #{tpu_custom_call.1} parent=1 // pred_region
      %88 = dma.done [#allocation9], 17408
    $region41: #{tpu_custom_call.1} parent=1 // pred_fallthru
      _
    // Predicated region
    $region42: #{tpu_custom_call.1} parent=1 // pred_check
      _
    $region43: #{tpu_custom_call.1} parent=1 // pred_check_branch
      %90 = sbr.rel (0) target = $region45
    $region44: #{tpu_custom_call.1} parent=1 // pred_region
      %91 = dma.done [#allocation9], 1280
    $region45: #{tpu_custom_call.1} parent=1 // pred_fallthru
      _
    %v93 = vld [vmem:[#allocation5] sm:$0xf]
    %v94 = vld [vmem:[#allocation5 + $0x4] sm:$0xf]
    %v95 = vld [vmem:[#allocation7] sm:$0xf]
    %v96 = vld [vmem:[#allocation7 + $0x4] sm:$0xf]
    %v97 = vld [vmem:[#allocation2] sm:$0xff]
    %v98 = vld [vmem:[#allocation2 + $0x8] sm:$0xff]
    %v99 = vpack.c.bf16 %v98, %v97
    %v100 = vld [vmem:[#allocation8] sm:$0xf]
    %v101 = vld [vmem:[#allocation8 + $0x4] sm:$0xf]
    %v102 = vld [vmem:[#allocation8 + $0x8] sm:$0xf]
    %v103 = vld [vmem:[#allocation8 + $0xc] sm:$0xf]
    %v104 = vld [vmem:[#allocation8 + $0x10] sm:$0xf]
    %v105 = vld [vmem:[#allocation8 + $0x14] sm:$0xf]
    %v106 = vld [vmem:[#allocation8 + $0x18] sm:$0xf]
    %v107 = vld [vmem:[#allocation8 + $0x1c] sm:$0xf]
    %v108 = vld [vmem:[#allocation8 + $0x20] sm:$0xf]
    %v109 = vld [vmem:[#allocation8 + $0x24] sm:$0xf]
    %v110 = vld [vmem:[#allocation8 + $0x28] sm:$0xf]
    %v111 = vld [vmem:[#allocation8 + $0x2c] sm:$0xf]
    %v112 = vld [vmem:[#allocation8 + $0x30] sm:$0xf]
    %v113 = vld [vmem:[#allocation8 + $0x34] sm:$0xf]
    %v114 = vld [vmem:[#allocation8 + $0x38] sm:$0xf]
    %v115 = vld [vmem:[#allocation8 + $0x3c] sm:$0xf]
    %s116 = scalar_lea.vmem [#allocation8], 64
    %v117 = vld [vmem:[%s116] sm:$0xf]
    %v118 = vld [vmem:[%s116 + $0x4] sm:$0xf]
    %v119 = vld [vmem:[%s116 + $0x8] sm:$0xf]
    %v120 = vld [vmem:[%s116 + $0xc] sm:$0xf]
    %v121 = vld [vmem:[%s116 + $0x10] sm:$0xf]
    %v122 = vld [vmem:[%s116 + $0x14] sm:$0xf]
    %v123 = vld [vmem:[%s116 + $0x18] sm:$0xf]
    %v124 = vld [vmem:[%s116 + $0x1c] sm:$0xf]
    %v125 = vld [vmem:[%s116 + $0x20] sm:$0xf]
    %v126 = vld [vmem:[%s116 + $0x24] sm:$0xf]
    %v127 = vld [vmem:[%s116 + $0x28] sm:$0xf]
    %v128 = vld [vmem:[%s116 + $0x2c] sm:$0xf]
    %v129 = vld [vmem:[%s116 + $0x30] sm:$0xf]
    %v130 = vld [vmem:[%s116 + $0x34] sm:$0xf]
    %v131 = vld [vmem:[%s116 + $0x38] sm:$0xf]
    %v132 = vld [vmem:[%s116 + $0x3c] sm:$0xf]
    %s133 = scalar_lea.vmem [#allocation8], 128
    %v134 = vld [vmem:[%s133] sm:$0xf]
    %v135 = vld [vmem:[%s133 + $0x4] sm:$0xf]
    %v136 = vld [vmem:[%s133 + $0x8] sm:$0xf]
    %v137 = vld [vmem:[%s133 + $0xc] sm:$0xf]
    %v138 = vld [vmem:[%s133 + $0x10] sm:$0xf]
    %v139 = vld [vmem:[%s133 + $0x14] sm:$0xf]
    %v140 = vld [vmem:[%s133 + $0x18] sm:$0xf]
    %v141 = vld [vmem:[%s133 + $0x1c] sm:$0xf]
    %v142 = vld [vmem:[%s133 + $0x20] sm:$0xf]
    %v143 = vld [vmem:[%s133 + $0x24] sm:$0xf]
    %v144 = vld [vmem:[%s133 + $0x28] sm:$0xf]
    %v145 = vld [vmem:[%s133 + $0x2c] sm:$0xf]
    %v146 = vld [vmem:[%s133 + $0x30] sm:$0xf]
    %v147 = vld [vmem:[%s133 + $0x34] sm:$0xf]
    %v148 = vld [vmem:[%s133 + $0x38] sm:$0xf]
    %v149 = vld [vmem:[%s133 + $0x3c] sm:$0xf]
    %v166 = vunpack.c.l.b16 %v100
    %v167 = vunpack.c.l.b16 %v101
    %v168 = vunpack.c.l.b16 %v102
    %v169 = vunpack.c.l.b16 %v103
    %v170 = vunpack.c.l.b16 %v104
    %v171 = vunpack.c.l.b16 %v105
    %v172 = vunpack.c.l.b16 %v106
    %v173 = vunpack.c.l.b16 %v107
    %v174 = vunpack.c.l.b16 %v108
    %v175 = vunpack.c.l.b16 %v109
    %v176 = vunpack.c.l.b16 %v110
    %v177 = vunpack.c.l.b16 %v111
    %v178 = vunpack.c.l.b16 %v112
    %v179 = vunpack.c.l.b16 %v113
    %v180 = vunpack.c.l.b16 %v114
    %v181 = vunpack.c.l.b16 %v115
    %v182 = vpack.c.b16 %v167, %v166
    %v183 = vpack.c.b16 %v169, %v168
    %v184 = vpack.c.b16 %v171, %v170
    %v185 = vpack.c.b16 %v173, %v172
    %v186 = vpack.c.b16 %v175, %v174
    %v187 = vpack.c.b16 %v177, %v176
    %v188 = vpack.c.b16 %v179, %v178
    %v189 = vpack.c.b16 %v181, %v180
    %198 = vmatprep.subr.bf16.mxu0 0
    %199 = vmatpush1.bf16.msra.mxu0 %v182
    %200 = vmatprep.subr.bf16.mxu0 0
    %201 = vmatpush1.bf16.msra.mxu0 %v183
    %202 = vmatprep.subr.bf16.mxu0 0
    %203 = vmatpush1.bf16.msra.mxu0 %v184
    %204 = vmatprep.subr.bf16.mxu0 0
    %205 = vmatpush1.bf16.msra.mxu0 %v185
    %206 = vmatprep.subr.bf16.mxu0 0
    %207 = vmatpush1.bf16.msra.mxu0 %v186
    %208 = vmatprep.subr.bf16.mxu0 0
    %209 = vmatpush1.bf16.msra.mxu0 %v187
    %210 = vmatprep.subr.bf16.mxu0 0
    %211 = vmatpush1.bf16.msra.mxu0 %v188
    %212 = vmatprep.subr.bf16.mxu0 0
    %213 = vmatpush1.bf16.msra.mxu0 %v189
    %214 = vmatprep.subr.bf16.mxu0 0
    %215 = vmatpush1.bf16.msra.mxu0 0
    %216 = vmatprep.subr.bf16.mxu0 0
    %217 = vmatpush1.bf16.msra.mxu0 0
    %218 = vmatprep.subr.bf16.mxu0 0
    %219 = vmatpush1.bf16.msra.mxu0 0
    %220 = vmatprep.subr.bf16.mxu0 0
    %221 = vmatpush1.bf16.msra.mxu0 0
    %222 = vmatprep.subr.bf16.mxu0 0
    %223 = vmatpush1.bf16.msra.mxu0 0
    %224 = vmatprep.subr.bf16.mxu0 0
    %225 = vmatpush1.bf16.msra.mxu0 0
    %226 = vmatprep.subr.bf16.mxu0 0
    %227 = vmatpush1.bf16.msra.mxu0 0
    %228 = vmatprep.subr.bf16.mxu0 0
    %229 = vmatpush1.bf16.msra.mxu0 0
    %230 = vmatprep.mubr.bf16.mxu0 0
    %231 = vmatmul.mubr.bf16.gmra.mrb[0].mxu0 %v99
    %v232 = vpop.f32.mrb[0].mxu0
    %v233 = vadd.f32 0.0, %v232
    %v234 = vpop.f32.mrb[0].mxu0
    %v235 = vpop.f32.mrb[0].mxu0
    %v236 = vadd.f32 0.0, %v235
    %v237 = vpop.f32.mrb[0].mxu0
    %238 = vdwg.mxu0
    %v239 = vpack.c.bf16 %v236, %v233
    %v240 = vld [vmem:[#allocation10] sm:$0xff]
    %v241 = vld [vmem:[#allocation10 + $0x8] sm:$0xff]
    %v244 = vunpack.c.l.b16 %v93
    %v245 = vunpack.c.l.b16 %v94
    %v246 = vpack.c.b16 %v245, %v244
    %vm247 = vcmask 130048
    %v249 = vsel %vm247, %v246, 0
    %251 = vmatprep.subr.bf16.mxu0 0
    %252 = vmatpush1.bf16.msra.mxu0 %v239
    %253 = vmatprep.subr.bf16.mxu0 0
    %254 = vmatpush1.bf16.msra.mxu0 0
    %255 = vmatprep.subr.bf16.mxu0 0
    %256 = vmatpush1.bf16.msra.mxu0 0
    %257 = vmatprep.subr.bf16.mxu0 0
    %258 = vmatpush1.bf16.msra.mxu0 0
    %259 = vmatprep.subr.bf16.mxu0 0
    %260 = vmatpush1.bf16.msra.mxu0 0
    %261 = vmatprep.subr.bf16.mxu0 0
    %262 = vmatpush1.bf16.msra.mxu0 0
    %263 = vmatprep.subr.bf16.mxu0 0
    %264 = vmatpush1.bf16.msra.mxu0 0
    %265 = vmatprep.subr.bf16.mxu0 0
    %266 = vmatpush1.bf16.msra.mxu0 0
    %267 = vmatprep.subr.bf16.mxu0 0
    %268 = vmatpush1.bf16.msra.mxu0 0
    %269 = vmatprep.subr.bf16.mxu0 0
    %270 = vmatpush1.bf16.msra.mxu0 0
    %271 = vmatprep.subr.bf16.mxu0 0
    %272 = vmatpush1.bf16.msra.mxu0 0
    %273 = vmatprep.subr.bf16.mxu0 0
    %274 = vmatpush1.bf16.msra.mxu0 0
    %275 = vmatprep.subr.bf16.mxu0 0
    %276 = vmatpush1.bf16.msra.mxu0 0
    %277 = vmatprep.subr.bf16.mxu0 0
    %278 = vmatpush1.bf16.msra.mxu0 0
    %279 = vmatprep.subr.bf16.mxu0 0
    %280 = vmatpush1.bf16.msra.mxu0 0
    %281 = vmatprep.subr.bf16.mxu0 0
    %282 = vmatpush1.bf16.msra.mxu0 0
    %283 = vmatprep.mubr.bf16.mxu0 0
    %284 = vmatmul.mubr.bf16.gmra.mrb[0].mxu0 %v249
    %v285 = vpop.f32.mrb[0].mxu0
    %v286 = vadd.f32 %v240, %v285
    %v287 = vpop.f32.mrb[0].mxu0
    %v288 = vpop.f32.mrb[0].mxu0
    %v289 = vadd.f32 %v241, %v288
    %v290 = vpop.f32.mrb[0].mxu0
    %291 = vdwg.mxu0
    %vm292 = vcmp.ge.f32.partialorder %v286, 0.0
    %vm293 = vcmp.ge.f32.partialorder %v289, 0.0
    %v294 = vmul.f32 %v286, 0.01
    %v295 = vmul.f32 %v289, 0.01
    %v296 = vsel %vm292, %v286, %v294
    %v297 = vsel %vm293, %v289, %v295
    %v298 = vpack.c.bf16 %v297, %v296
    %v301 = vunpack.c.l.b16 %v95
    %v302 = vunpack.c.l.b16 %v96
    %v303 = vpack.c.b16 %v302, %v301
    %v305 = vsel %vm247, %v303, 0
    %307 = vmatprep.subr.bf16.mxu0 0
    %308 = vmatpush1.bf16.msra.mxu0 %v298
    %309 = vmatprep.subr.bf16.mxu0 0
    %310 = vmatpush1.bf16.msra.mxu0 0
    %311 = vmatprep.subr.bf16.mxu0 0
    %312 = vmatpush1.bf16.msra.mxu0 0
    %313 = vmatprep.subr.bf16.mxu0 0
    %314 = vmatpush1.bf16.msra.mxu0 0
    %315 = vmatprep.subr.bf16.mxu0 0
    %316 = vmatpush1.bf16.msra.mxu0 0
    %317 = vmatprep.subr.bf16.mxu0 0
    %318 = vmatpush1.bf16.msra.mxu0 0
    %319 = vmatprep.subr.bf16.mxu0 0
    %320 = vmatpush1.bf16.msra.mxu0 0
    %321 = vmatprep.subr.bf16.mxu0 0
    %322 = vmatpush1.bf16.msra.mxu0 0
    %323 = vmatprep.subr.bf16.mxu0 0
    %324 = vmatpush1.bf16.msra.mxu0 0
    %325 = vmatprep.subr.bf16.mxu0 0
    %326 = vmatpush1.bf16.msra.mxu0 0
    %327 = vmatprep.subr.bf16.mxu0 0
    %328 = vmatpush1.bf16.msra.mxu0 0
    %329 = vmatprep.subr.bf16.mxu0 0
    %330 = vmatpush1.bf16.msra.mxu0 0
    %331 = vmatprep.subr.bf16.mxu0 0
    %332 = vmatpush1.bf16.msra.mxu0 0
    %333 = vmatprep.subr.bf16.mxu0 0
    %334 = vmatpush1.bf16.msra.mxu0 0
    %335 = vmatprep.subr.bf16.mxu0 0
    %336 = vmatpush1.bf16.msra.mxu0 0
    %337 = vmatprep.subr.bf16.mxu0 0
    %338 = vmatpush1.bf16.msra.mxu0 0
    %339 = vmatprep.mubr.bf16.mxu0 0
    %340 = vmatmul.mubr.bf16.gmra.mrb[0].mxu0 %v305
    %v341 = vpop.f32.mrb[0].mxu0
    %v342 = vadd.f32 0.0, %v341
    %v343 = vpop.f32.mrb[0].mxu0
    %v344 = vpop.f32.mrb[0].mxu0
    %v345 = vadd.f32 0.0, %v344
    %v346 = vpop.f32.mrb[0].mxu0
    %347 = vdwg.mxu0
    %v348 = vpack.c.bf16 %v345, %v342
    %v365 = vunpack.c.l.b16 %v134
    %v366 = vunpack.c.l.b16 %v135
    %v367 = vunpack.c.l.b16 %v136
    %v368 = vunpack.c.l.b16 %v137
    %v369 = vunpack.c.l.b16 %v138
    %v370 = vunpack.c.l.b16 %v139
    %v371 = vunpack.c.l.b16 %v140
    %v372 = vunpack.c.l.b16 %v141
    %v373 = vunpack.c.l.b16 %v142
    %v374 = vunpack.c.l.b16 %v143
    %v375 = vunpack.c.l.b16 %v144
    %v376 = vunpack.c.l.b16 %v145
    %v377 = vunpack.c.l.b16 %v146
    %v378 = vunpack.c.l.b16 %v147
    %v379 = vunpack.c.l.b16 %v148
    %v380 = vunpack.c.l.b16 %v149
    %v381 = vpack.c.b16 %v366, %v365
    %v382 = vpack.c.b16 %v368, %v367
    %v383 = vpack.c.b16 %v370, %v369
    %v384 = vpack.c.b16 %v372, %v371
    %v385 = vpack.c.b16 %v374, %v373
    %v386 = vpack.c.b16 %v376, %v375
    %v387 = vpack.c.b16 %v378, %v377
    %v388 = vpack.c.b16 %v380, %v379
    %397 = vmatprep.subr.bf16.mxu0 0
    %398 = vmatpush1.bf16.msra.mxu0 %v381
    %399 = vmatprep.subr.bf16.mxu0 0
    %400 = vmatpush1.bf16.msra.mxu0 %v382
    %401 = vmatprep.subr.bf16.mxu0 0
    %402 = vmatpush1.bf16.msra.mxu0 %v383
    %403 = vmatprep.subr.bf16.mxu0 0
    %404 = vmatpush1.bf16.msra.mxu0 %v384
    %405 = vmatprep.subr.bf16.mxu0 0
    %406 = vmatpush1.bf16.msra.mxu0 %v385
    %407 = vmatprep.subr.bf16.mxu0 0
    %408 = vmatpush1.bf16.msra.mxu0 %v386
    %409 = vmatprep.subr.bf16.mxu0 0
    %410 = vmatpush1.bf16.msra.mxu0 %v387
    %411 = vmatprep.subr.bf16.mxu0 0
    %412 = vmatpush1.bf16.msra.mxu0 %v388
    %413 = vmatprep.subr.bf16.mxu0 0
    %414 = vmatpush1.bf16.msra.mxu0 0
    %415 = vmatprep.subr.bf16.mxu0 0
    %416 = vmatpush1.bf16.msra.mxu0 0
    %417 = vmatprep.subr.bf16.mxu0 0
    %418 = vmatpush1.bf16.msra.mxu0 0
    %419 = vmatprep.subr.bf16.mxu0 0
    %420 = vmatpush1.bf16.msra.mxu0 0
    %421 = vmatprep.subr.bf16.mxu0 0
    %422 = vmatpush1.bf16.msra.mxu0 0
    %423 = vmatprep.subr.bf16.mxu0 0
    %424 = vmatpush1.bf16.msra.mxu0 0
    %425 = vmatprep.subr.bf16.mxu0 0
    %426 = vmatpush1.bf16.msra.mxu0 0
    %427 = vmatprep.subr.bf16.mxu0 0
    %428 = vmatpush1.bf16.msra.mxu0 0
    %429 = vmatprep.mubr.bf16.mxu0 0
    %430 = vmatmul.mubr.bf16.gmra.mrb[0].mxu0 %v348
    %v431 = vpop.f32.mrb[0].mxu0
    %v432 = vadd.f32 0.0, %v431
    %v433 = vpop.f32.mrb[0].mxu0
    %v434 = vpop.f32.mrb[0].mxu0
    %v435 = vadd.f32 0.0, %v434
    %v436 = vpop.f32.mrb[0].mxu0
    %437 = vdwg.mxu0
    %v454 = vunpack.c.l.b16 %v117
    %v455 = vunpack.c.l.b16 %v118
    %v456 = vunpack.c.l.b16 %v119
    %v457 = vunpack.c.l.b16 %v120
    %v458 = vunpack.c.l.b16 %v121
    %v459 = vunpack.c.l.b16 %v122
    %v460 = vunpack.c.l.b16 %v123
    %v461 = vunpack.c.l.b16 %v124
    %v462 = vunpack.c.l.b16 %v125
    %v463 = vunpack.c.l.b16 %v126
    %v464 = vunpack.c.l.b16 %v127
    %v465 = vunpack.c.l.b16 %v128
    %v466 = vunpack.c.l.b16 %v129
    %v467 = vunpack.c.l.b16 %v130
    %v468 = vunpack.c.l.b16 %v131
    %v469 = vunpack.c.l.b16 %v132
    %v470 = vpack.c.b16 %v455, %v454
    %v471 = vpack.c.b16 %v457, %v456
    %v472 = vpack.c.b16 %v459, %v458
    %v473 = vpack.c.b16 %v461, %v460
    %v474 = vpack.c.b16 %v463, %v462
    %v475 = vpack.c.b16 %v465, %v464
    %v476 = vpack.c.b16 %v467, %v466
    %v477 = vpack.c.b16 %v469, %v468
    %486 = vmatprep.subr.bf16.mxu0 0
    %487 = vmatpush1.bf16.msra.mxu0 %v470
    %488 = vmatprep.subr.bf16.mxu0 0
    %489 = vmatpush1.bf16.msra.mxu0 %v471
    %490 = vmatprep.subr.bf16.mxu0 0
    %491 = vmatpush1.bf16.msra.mxu0 %v472
    %492 = vmatprep.subr.bf16.mxu0 0
    %493 = vmatpush1.bf16.msra.mxu0 %v473
    %494 = vmatprep.subr.bf16.mxu0 0
    %495 = vmatpush1.bf16.msra.mxu0 %v474
    %496 = vmatprep.subr.bf16.mxu0 0
    %497 = vmatpush1.bf16.msra.mxu0 %v475
    %498 = vmatprep.subr.bf16.mxu0 0
    %499 = vmatpush1.bf16.msra.mxu0 %v476
    %500 = vmatprep.subr.bf16.mxu0 0
    %501 = vmatpush1.bf16.msra.mxu0 %v477
    %502 = vmatprep.subr.bf16.mxu0 0
    %503 = vmatpush1.bf16.msra.mxu0 0
    %504 = vmatprep.subr.bf16.mxu0 0
    %505 = vmatpush1.bf16.msra.mxu0 0
    %506 = vmatprep.subr.bf16.mxu0 0
    %507 = vmatpush1.bf16.msra.mxu0 0
    %508 = vmatprep.subr.bf16.mxu0 0
    %509 = vmatpush1.bf16.msra.mxu0 0
    %510 = vmatprep.subr.bf16.mxu0 0
    %511 = vmatpush1.bf16.msra.mxu0 0
    %512 = vmatprep.subr.bf16.mxu0 0
    %513 = vmatpush1.bf16.msra.mxu0 0
    %514 = vmatprep.subr.bf16.mxu0 0
    %515 = vmatpush1.bf16.msra.mxu0 0
    %516 = vmatprep.subr.bf16.mxu0 0
    %517 = vmatpush1.bf16.msra.mxu0 0
    %518 = vmatprep.mubr.bf16.mxu0 0
    %519 = vmatmul.mubr.bf16.gmra.mrb[0].mxu0 %v99
    %v520 = vpop.f32.mrb[0].mxu0
    %v521 = vadd.f32 %v432, %v520
    %v522 = vpop.f32.mrb[0].mxu0
    %v523 = vpop.f32.mrb[0].mxu0
    %v524 = vadd.f32 %v435, %v523
    %v525 = vpop.f32.mrb[0].mxu0
    %526 = vdwg.mxu0
    %v527 = vld [vmem:[%s5] sm:$0x1]
    %v529 = vlaneseq
    %v530 = vshrl.u32 %v529, 7
    %v531 = vsub.s32 0, %v530
    %v532 = vrot.slane %v527, %v531
    %v534 = vadd.f32 %v521, %v532
    %v535 = vadd.f32 %v524, %v532
    %v536 = vmax.f32 %v534, 0.0
    %v537 = vmax.f32 %v535, 0.0
    %v538 = vpack.c.bf16 %v537, %v536
    %s539 = scalar_lea.vmem [#allocation8], 192
    %v540 = vld [vmem:[%s539] sm:$0xf]
    %v541 = vld [vmem:[%s539 + $0x4] sm:$0xf]
    %v542 = vld [vmem:[%s539 + $0x8] sm:$0xf]
    %v543 = vld [vmem:[%s539 + $0xc] sm:$0xf]
    %v544 = vld [vmem:[%s539 + $0x10] sm:$0xf]
    %v545 = vld [vmem:[%s539 + $0x14] sm:$0xf]
    %v546 = vld [vmem:[%s539 + $0x18] sm:$0xf]
    %v547 = vld [vmem:[%s539 + $0x1c] sm:$0xf]
    %v548 = vld [vmem:[%s539 + $0x20] sm:$0xf]
    %v549 = vld [vmem:[%s539 + $0x24] sm:$0xf]
    %v550 = vld [vmem:[%s539 + $0x28] sm:$0xf]
    %v551 = vld [vmem:[%s539 + $0x2c] sm:$0xf]
    %v552 = vld [vmem:[%s539 + $0x30] sm:$0xf]
    %v553 = vld [vmem:[%s539 + $0x34] sm:$0xf]
    %v554 = vld [vmem:[%s539 + $0x38] sm:$0xf]
    %v555 = vld [vmem:[%s539 + $0x3c] sm:$0xf]
    %s556 = scalar_lea.vmem [#allocation8], 256
    %v557 = vld [vmem:[%s556] sm:$0xf]
    %v558 = vld [vmem:[%s556 + $0x4] sm:$0xf]
    %v559 = vld [vmem:[%s556 + $0x8] sm:$0xf]
    %v560 = vld [vmem:[%s556 + $0xc] sm:$0xf]
    %v561 = vld [vmem:[%s556 + $0x10] sm:$0xf]
    %v562 = vld [vmem:[%s556 + $0x14] sm:$0xf]
    %v563 = vld [vmem:[%s556 + $0x18] sm:$0xf]
    %v564 = vld [vmem:[%s556 + $0x1c] sm:$0xf]
    %v565 = vld [vmem:[%s556 + $0x20] sm:$0xf]
    %v566 = vld [vmem:[%s556 + $0x24] sm:$0xf]
    %v567 = vld [vmem:[%s556 + $0x28] sm:$0xf]
    %v568 = vld [vmem:[%s556 + $0x2c] sm:$0xf]
    %v569 = vld [vmem:[%s556 + $0x30] sm:$0xf]
    %v570 = vld [vmem:[%s556 + $0x34] sm:$0xf]
    %v571 = vld [vmem:[%s556 + $0x38] sm:$0xf]
    %v572 = vld [vmem:[%s556 + $0x3c] sm:$0xf]
    %s573 = scalar_lea.vmem [#allocation8], 320
    %v574 = vld [vmem:[%s573] sm:$0xf]
    %v575 = vld [vmem:[%s573 + $0x4] sm:$0xf]
    %v576 = vld [vmem:[%s573 + $0x8] sm:$0xf]
    %v577 = vld [vmem:[%s573 + $0xc] sm:$0xf]
    %v578 = vld [vmem:[%s573 + $0x10] sm:$0xf]
    %v579 = vld [vmem:[%s573 + $0x14] sm:$0xf]
    %v580 = vld [vmem:[%s573 + $0x18] sm:$0xf]
    %v581 = vld [vmem:[%s573 + $0x1c] sm:$0xf]
    %v582 = vld [vmem:[%s573 + $0x20] sm:$0xf]
    %v583 = vld [vmem:[%s573 + $0x24] sm:$0xf]
    %v584 = vld [vmem:[%s573 + $0x28] sm:$0xf]
    %v585 = vld [vmem:[%s573 + $0x2c] sm:$0xf]
    %v586 = vld [vmem:[%s573 + $0x30] sm:$0xf]
    %v587 = vld [vmem:[%s573 + $0x34] sm:$0xf]
    %v588 = vld [vmem:[%s573 + $0x38] sm:$0xf]
    %v589 = vld [vmem:[%s573 + $0x3c] sm:$0xf]
    %v606 = vunpack.c.l.b16 %v540
    %v607 = vunpack.c.l.b16 %v541
    %v608 = vunpack.c.l.b16 %v542
    %v609 = vunpack.c.l.b16 %v543
    %v610 = vunpack.c.l.b16 %v544
    %v611 = vunpack.c.l.b16 %v545
    %v612 = vunpack.c.l.b16 %v546
    %v613 = vunpack.c.l.b16 %v547
    %v614 = vunpack.c.l.b16 %v548
    %v615 = vunpack.c.l.b16 %v549
    %v616 = vunpack.c.l.b16 %v550
    %v617 = vunpack.c.l.b16 %v551
    %v618 = vunpack.c.l.b16 %v552
    %v619 = vunpack.c.l.b16 %v553
    %v620 = vunpack.c.l.b16 %v554
    %v621 = vunpack.c.l.b16 %v555
    %v622 = vpack.c.b16 %v607, %v606
    %v623 = vpack.c.b16 %v609, %v608
    %v624 = vpack.c.b16 %v611, %v610
    %v625 = vpack.c.b16 %v613, %v612
    %v626 = vpack.c.b16 %v615, %v614
    %v627 = vpack.c.b16 %v617, %v616
    %v628 = vpack.c.b16 %v619, %v618
    %v629 = vpack.c.b16 %v621, %v620
    %638 = vmatprep.subr.bf16.mxu0 0
    %639 = vmatpush1.bf16.msra.mxu0 %v622
    %640 = vmatprep.subr.bf16.mxu0 0
    %641 = vmatpush1.bf16.msra.mxu0 %v623
    %642 = vmatprep.subr.bf16.mxu0 0
    %643 = vmatpush1.bf16.msra.mxu0 %v624
    %644 = vmatprep.subr.bf16.mxu0 0
    %645 = vmatpush1.bf16.msra.mxu0 %v625
    %646 = vmatprep.subr.bf16.mxu0 0
    %647 = vmatpush1.bf16.msra.mxu0 %v626
    %648 = vmatprep.subr.bf16.mxu0 0
    %649 = vmatpush1.bf16.msra.mxu0 %v627
    %650 = vmatprep.subr.bf16.mxu0 0
    %651 = vmatpush1.bf16.msra.mxu0 %v628
    %652 = vmatprep.subr.bf16.mxu0 0
    %653 = vmatpush1.bf16.msra.mxu0 %v629
    %654 = vmatprep.subr.bf16.mxu0 0
    %655 = vmatpush1.bf16.msra.mxu0 0
    %656 = vmatprep.subr.bf16.mxu0 0
    %657 = vmatpush1.bf16.msra.mxu0 0
    %658 = vmatprep.subr.bf16.mxu0 0
    %659 = vmatpush1.bf16.msra.mxu0 0
    %660 = vmatprep.subr.bf16.mxu0 0
    %661 = vmatpush1.bf16.msra.mxu0 0
    %662 = vmatprep.subr.bf16.mxu0 0
    %663 = vmatpush1.bf16.msra.mxu0 0
    %664 = vmatprep.subr.bf16.mxu0 0
    %665 = vmatpush1.bf16.msra.mxu0 0
    %666 = vmatprep.subr.bf16.mxu0 0
    %667 = vmatpush1.bf16.msra.mxu0 0
    %668 = vmatprep.subr.bf16.mxu0 0
    %669 = vmatpush1.bf16.msra.mxu0 0
    %670 = vmatprep.mubr.bf16.mxu0 0
    %671 = vmatmul.mubr.bf16.gmra.mrb[0].mxu0 %v538
    %v672 = vpop.f32.mrb[0].mxu0
    %v673 = vadd.f32 0.0, %v672
    %v674 = vpop.f32.mrb[0].mxu0
    %v675 = vpop.f32.mrb[0].mxu0
    %v676 = vadd.f32 0.0, %v675
    %v677 = vpop.f32.mrb[0].mxu0
    %678 = vdwg.mxu0
    %v679 = vpack.c.bf16 %v676, %v673
    %s680 = scalar_lea.vmem [#allocation10], 16
    %v681 = vld [vmem:[%s680] sm:$0xff]
    %v682 = vld [vmem:[%s680 + $0x8] sm:$0xff]
    %683 = vmatprep.subr.bf16.mxu0 0
    %684 = vmatpush1.bf16.msra.mxu0 %v679
    %685 = vmatprep.subr.bf16.mxu0 0
    %686 = vmatpush1.bf16.msra.mxu0 0
    %687 = vmatprep.subr.bf16.mxu0 0
    %688 = vmatpush1.bf16.msra.mxu0 0
    %689 = vmatprep.subr.bf16.mxu0 0
    %690 = vmatpush1.bf16.msra.mxu0 0
    %691 = vmatprep.subr.bf16.mxu0 0
    %692 = vmatpush1.bf16.msra.mxu0 0
    %693 = vmatprep.subr.bf16.mxu0 0
    %694 = vmatpush1.bf16.msra.mxu0 0
    %695 = vmatprep.subr.bf16.mxu0 0
    %696 = vmatpush1.bf16.msra.mxu0 0
    %697 = vmatprep.subr.bf16.mxu0 0
    %698 = vmatpush1.bf16.msra.mxu0 0
    %699 = vmatprep.subr.bf16.mxu0 0
    %700 = vmatpush1.bf16.msra.mxu0 0
    %701 = vmatprep.subr.bf16.mxu0 0
    %702 = vmatpush1.bf16.msra.mxu0 0
    %703 = vmatprep.subr.bf16.mxu0 0
    %704 = vmatpush1.bf16.msra.mxu0 0
    %705 = vmatprep.subr.bf16.mxu0 0
    %706 = vmatpush1.bf16.msra.mxu0 0
    %707 = vmatprep.subr.bf16.mxu0 0
    %708 = vmatpush1.bf16.msra.mxu0 0
    %709 = vmatprep.subr.bf16.mxu0 0
    %710 = vmatpush1.bf16.msra.mxu0 0
    %711 = vmatprep.subr.bf16.mxu0 0
    %712 = vmatpush1.bf16.msra.mxu0 0
    %713 = vmatprep.subr.bf16.mxu0 0
    %714 = vmatpush1.bf16.msra.mxu0 0
    %715 = vmatprep.mubr.bf16.mxu0 0
    %716 = vmatmul.mubr.bf16.gmra.mrb[0].mxu0 %v249
    %v717 = vpop.f32.mrb[0].mxu0
    %v718 = vadd.f32 %v681, %v717
    %v719 = vpop.f32.mrb[0].mxu0
    %v720 = vpop.f32.mrb[0].mxu0
    %v721 = vadd.f32 %v682, %v720
    %v722 = vpop.f32.mrb[0].mxu0
    %723 = vdwg.mxu0
    %vm724 = vcmp.ge.f32.partialorder %v718, 0.0
    %vm725 = vcmp.ge.f32.partialorder %v721, 0.0
    %v726 = vmul.f32 %v718, 0.01
    %v727 = vmul.f32 %v721, 0.01
    %v728 = vsel %vm724, %v718, %v726
    %v729 = vsel %vm725, %v721, %v727
    %v730 = vpack.c.bf16 %v729, %v728
    %731 = vmatprep.subr.bf16.mxu0 0
    %732 = vmatpush1.bf16.msra.mxu0 %v730
    %733 = vmatprep.subr.bf16.mxu0 0
    %734 = vmatpush1.bf16.msra.mxu0 0
    %735 = vmatprep.subr.bf16.mxu0 0
    %736 = vmatpush1.bf16.msra.mxu0 0
    %737 = vmatprep.subr.bf16.mxu0 0
    %738 = vmatpush1.bf16.msra.mxu0 0
    %739 = vmatprep.subr.bf16.mxu0 0
    %740 = vmatpush1.bf16.msra.mxu0 0
    %741 = vmatprep.subr.bf16.mxu0 0
    %742 = vmatpush1.bf16.msra.mxu0 0
    %743 = vmatprep.subr.bf16.mxu0 0
    %744 = vmatpush1.bf16.msra.mxu0 0
    %745 = vmatprep.subr.bf16.mxu0 0
    %746 = vmatpush1.bf16.msra.mxu0 0
    %747 = vmatprep.subr.bf16.mxu0 0
    %748 = vmatpush1.bf16.msra.mxu0 0
    %749 = vmatprep.subr.bf16.mxu0 0
    %750 = vmatpush1.bf16.msra.mxu0 0
    %751 = vmatprep.subr.bf16.mxu0 0
    %752 = vmatpush1.bf16.msra.mxu0 0
    %753 = vmatprep.subr.bf16.mxu0 0
    %754 = vmatpush1.bf16.msra.mxu0 0
    %755 = vmatprep.subr.bf16.mxu0 0
    %756 = vmatpush1.bf16.msra.mxu0 0
    %757 = vmatprep.subr.bf16.mxu0 0
    %758 = vmatpush1.bf16.msra.mxu0 0
    %759 = vmatprep.subr.bf16.mxu0 0
    %760 = vmatpush1.bf16.msra.mxu0 0
    %761 = vmatprep.subr.bf16.mxu0 0
    %762 = vmatpush1.bf16.msra.mxu0 0
    %763 = vmatprep.mubr.bf16.mxu0 0
    %764 = vmatmul.mubr.bf16.gmra.mrb[0].mxu0 %v305
    %v765 = vpop.f32.mrb[0].mxu0
    %v766 = vadd.f32 0.0, %v765
    %v767 = vpop.f32.mrb[0].mxu0
    %v768 = vpop.f32.mrb[0].mxu0
    %v769 = vadd.f32 0.0, %v768
    %v770 = vpop.f32.mrb[0].mxu0
    %771 = vdwg.mxu0
    %v772 = vpack.c.bf16 %v769, %v766
    %v789 = vunpack.c.l.b16 %v574
    %v790 = vunpack.c.l.b16 %v575
    %v791 = vunpack.c.l.b16 %v576
    %v792 = vunpack.c.l.b16 %v577
    %v793 = vunpack.c.l.b16 %v578
    %v794 = vunpack.c.l.b16 %v579
    %v795 = vunpack.c.l.b16 %v580
    %v796 = vunpack.c.l.b16 %v581
    %v797 = vunpack.c.l.b16 %v582
    %v798 = vunpack.c.l.b16 %v583
    %v799 = vunpack.c.l.b16 %v584
    %v800 = vunpack.c.l.b16 %v585
    %v801 = vunpack.c.l.b16 %v586
    %v802 = vunpack.c.l.b16 %v587
    %v803 = vunpack.c.l.b16 %v588
    %v804 = vunpack.c.l.b16 %v589
    %v805 = vpack.c.b16 %v790, %v789
    %v806 = vpack.c.b16 %v792, %v791
    %v807 = vpack.c.b16 %v794, %v793
    %v808 = vpack.c.b16 %v796, %v795
    %v809 = vpack.c.b16 %v798, %v797
    %v810 = vpack.c.b16 %v800, %v799
    %v811 = vpack.c.b16 %v802, %v801
    %v812 = vpack.c.b16 %v804, %v803
    %821 = vmatprep.subr.bf16.mxu0 0
    %822 = vmatpush1.bf16.msra.mxu0 %v805
    %823 = vmatprep.subr.bf16.mxu0 0
    %824 = vmatpush1.bf16.msra.mxu0 %v806
    %825 = vmatprep.subr.bf16.mxu0 0
    %826 = vmatpush1.bf16.msra.mxu0 %v807
    %827 = vmatprep.subr.bf16.mxu0 0
    %828 = vmatpush1.bf16.msra.mxu0 %v808
    %829 = vmatprep.subr.bf16.mxu0 0
    %830 = vmatpush1.bf16.msra.mxu0 %v809
    %831 = vmatprep.subr.bf16.mxu0 0
    %832 = vmatpush1.bf16.msra.mxu0 %v810
    %833 = vmatprep.subr.bf16.mxu0 0
    %834 = vmatpush1.bf16.msra.mxu0 %v811
    %835 = vmatprep.subr.bf16.mxu0 0
    %836 = vmatpush1.bf16.msra.mxu0 %v812
    %837 = vmatprep.subr.bf16.mxu0 0
    %838 = vmatpush1.bf16.msra.mxu0 0
    %839 = vmatprep.subr.bf16.mxu0 0
    %840 = vmatpush1.bf16.msra.mxu0 0
    %841 = vmatprep.subr.bf16.mxu0 0
    %842 = vmatpush1.bf16.msra.mxu0 0
    %843 = vmatprep.subr.bf16.mxu0 0
    %844 = vmatpush1.bf16.msra.mxu0 0
    %845 = vmatprep.subr.bf16.mxu0 0
    %846 = vmatpush1.bf16.msra.mxu0 0
    %847 = vmatprep.subr.bf16.mxu0 0
    %848 = vmatpush1.bf16.msra.mxu0 0
    %849 = vmatprep.subr.bf16.mxu0 0
    %850 = vmatpush1.bf16.msra.mxu0 0
    %851 = vmatprep.subr.bf16.mxu0 0
    %852 = vmatpush1.bf16.msra.mxu0 0
    %853 = vmatprep.mubr.bf16.mxu0 0
    %854 = vmatmul.mubr.bf16.gmra.mrb[0].mxu0 %v772
    %v855 = vpop.f32.mrb[0].mxu0
    %v856 = vadd.f32 0.0, %v855
    %v857 = vpop.f32.mrb[0].mxu0
    %v858 = vpop.f32.mrb[0].mxu0
    %v859 = vadd.f32 0.0, %v858
    %v860 = vpop.f32.mrb[0].mxu0
    %861 = vdwg.mxu0
    %v878 = vunpack.c.l.b16 %v557
    %v879 = vunpack.c.l.b16 %v558
    %v880 = vunpack.c.l.b16 %v559
    %v881 = vunpack.c.l.b16 %v560
    %v882 = vunpack.c.l.b16 %v561
    %v883 = vunpack.c.l.b16 %v562
    %v884 = vunpack.c.l.b16 %v563
    %v885 = vunpack.c.l.b16 %v564
    %v886 = vunpack.c.l.b16 %v565
    %v887 = vunpack.c.l.b16 %v566
    %v888 = vunpack.c.l.b16 %v567
    %v889 = vunpack.c.l.b16 %v568
    %v890 = vunpack.c.l.b16 %v569
    %v891 = vunpack.c.l.b16 %v570
    %v892 = vunpack.c.l.b16 %v571
    %v893 = vunpack.c.l.b16 %v572
    %v894 = vpack.c.b16 %v879, %v878
    %v895 = vpack.c.b16 %v881, %v880
    %v896 = vpack.c.b16 %v883, %v882
    %v897 = vpack.c.b16 %v885, %v884
    %v898 = vpack.c.b16 %v887, %v886
    %v899 = vpack.c.b16 %v889, %v888
    %v900 = vpack.c.b16 %v891, %v890
    %v901 = vpack.c.b16 %v893, %v892
    %910 = vmatprep.subr.bf16.mxu0 0
    %911 = vmatpush1.bf16.msra.mxu0 %v894
    %912 = vmatprep.subr.bf16.mxu0 0
    %913 = vmatpush1.bf16.msra.mxu0 %v895
    %914 = vmatprep.subr.bf16.mxu0 0
    %915 = vmatpush1.bf16.msra.mxu0 %v896
    %916 = vmatprep.subr.bf16.mxu0 0
    %917 = vmatpush1.bf16.msra.mxu0 %v897
    %918 = vmatprep.subr.bf16.mxu0 0
    %919 = vmatpush1.bf16.msra.mxu0 %v898
    %920 = vmatprep.subr.bf16.mxu0 0
    %921 = vmatpush1.bf16.msra.mxu0 %v899
    %922 = vmatprep.subr.bf16.mxu0 0
    %923 = vmatpush1.bf16.msra.mxu0 %v900
    %924 = vmatprep.subr.bf16.mxu0 0
    %925 = vmatpush1.bf16.msra.mxu0 %v901
    %926 = vmatprep.subr.bf16.mxu0 0
    %927 = vmatpush1.bf16.msra.mxu0 0
    %928 = vmatprep.subr.bf16.mxu0 0
    %929 = vmatpush1.bf16.msra.mxu0 0
    %930 = vmatprep.subr.bf16.mxu0 0
    %931 = vmatpush1.bf16.msra.mxu0 0
    %932 = vmatprep.subr.bf16.mxu0 0
    %933 = vmatpush1.bf16.msra.mxu0 0
    %934 = vmatprep.subr.bf16.mxu0 0
    %935 = vmatpush1.bf16.msra.mxu0 0
    %936 = vmatprep.subr.bf16.mxu0 0
    %937 = vmatpush1.bf16.msra.mxu0 0
    %938 = vmatprep.subr.bf16.mxu0 0
    %939 = vmatpush1.bf16.msra.mxu0 0
    %940 = vmatprep.subr.bf16.mxu0 0
    %941 = vmatpush1.bf16.msra.mxu0 0
    %942 = vmatprep.mubr.bf16.mxu0 0
    %943 = vmatmul.mubr.bf16.gmra.mrb[0].mxu0 %v538
    %v944 = vpop.f32.mrb[0].mxu0
    %v945 = vadd.f32 %v856, %v944
    %v946 = vpop.f32.mrb[0].mxu0
    %v947 = vpop.f32.mrb[0].mxu0
    %v948 = vadd.f32 %v859, %v947
    %v949 = vpop.f32.mrb[0].mxu0
    %950 = vdwg.mxu0
    %s951 = scalar_lea.vmem %s5, 1
    %v952 = vld [vmem:[%s951] sm:$0x1]
    %v954 = vlaneseq
    %v955 = vshrl.u32 %v954, 7
    %v956 = vsub.s32 0, %v955
    %v957 = vrot.slane %v952, %v956
    %v959 = vadd.f32 %v945, %v957
    %v960 = vadd.f32 %v948, %v957
    %v961 = vmax.f32 %v959, 0.0
    %v962 = vmax.f32 %v960, 0.0
    %v963 = vpack.c.bf16 %v962, %v961
    %s964 = scalar_lea.vmem [#allocation8], 384
    %v965 = vld [vmem:[%s964] sm:$0xf]
    %v966 = vld [vmem:[%s964 + $0x4] sm:$0xf]
    %v967 = vld [vmem:[%s964 + $0x8] sm:$0xf]
    %v968 = vld [vmem:[%s964 + $0xc] sm:$0xf]
    %v969 = vld [vmem:[%s964 + $0x10] sm:$0xf]
    %v970 = vld [vmem:[%s964 + $0x14] sm:$0xf]
    %v971 = vld [vmem:[%s964 + $0x18] sm:$0xf]
    %v972 = vld [vmem:[%s964 + $0x1c] sm:$0xf]
    %v973 = vld [vmem:[%s964 + $0x20] sm:$0xf]
    %v974 = vld [vmem:[%s964 + $0x24] sm:$0xf]
    %v975 = vld [vmem:[%s964 + $0x28] sm:$0xf]
    %v976 = vld [vmem:[%s964 + $0x2c] sm:$0xf]
    %v977 = vld [vmem:[%s964 + $0x30] sm:$0xf]
    %v978 = vld [vmem:[%s964 + $0x34] sm:$0xf]
    %v979 = vld [vmem:[%s964 + $0x38] sm:$0xf]
    %v980 = vld [vmem:[%s964 + $0x3c] sm:$0xf]
    %s981 = scalar_lea.vmem [#allocation8], 448
    %v982 = vld [vmem:[%s981] sm:$0xf]
    %v983 = vld [vmem:[%s981 + $0x4] sm:$0xf]
    %v984 = vld [vmem:[%s981 + $0x8] sm:$0xf]
    %v985 = vld [vmem:[%s981 + $0xc] sm:$0xf]
    %v986 = vld [vmem:[%s981 + $0x10] sm:$0xf]
    %v987 = vld [vmem:[%s981 + $0x14] sm:$0xf]
    %v988 = vld [vmem:[%s981 + $0x18] sm:$0xf]
    %v989 = vld [vmem:[%s981 + $0x1c] sm:$0xf]
    %v990 = vld [vmem:[%s981 + $0x20] sm:$0xf]
    %v991 = vld [vmem:[%s981 + $0x24] sm:$0xf]
    %v992 = vld [vmem:[%s981 + $0x28] sm:$0xf]
    %v993 = vld [vmem:[%s981 + $0x2c] sm:$0xf]
    %v994 = vld [vmem:[%s981 + $0x30] sm:$0xf]
    %v995 = vld [vmem:[%s981 + $0x34] sm:$0xf]
    %v996 = vld [vmem:[%s981 + $0x38] sm:$0xf]
    %v997 = vld [vmem:[%s981 + $0x3c] sm:$0xf]
    %s998 = scalar_lea.vmem [#allocation8], 512
    %v999 = vld [vmem:[%s998] sm:$0xf]
    %v1000 = vld [vmem:[%s998 + $0x4] sm:$0xf]
    %v1001 = vld [vmem:[%s998 + $0x8] sm:$0xf]
    %v1002 = vld [vmem:[%s998 + $0xc] sm:$0xf]
    %v1003 = vld [vmem:[%s998 + $0x10] sm:$0xf]
    %v1004 = vld [vmem:[%s998 + $0x14] sm:$0xf]
    %v1005 = vld [vmem:[%s998 + $0x18] sm:$0xf]
    %v1006 = vld [vmem:[%s998 + $0x1c] sm:$0xf]
    %v1007 = vld [vmem:[%s998 + $0x20] sm:$0xf]
    %v1008 = vld [vmem:[%s998 + $0x24] sm:$0xf]
    %v1009 = vld [vmem:[%s998 + $0x28] sm:$0xf]
    %v1010 = vld [vmem:[%s998 + $0x2c] sm:$0xf]
    %v1011 = vld [vmem:[%s998 + $0x30] sm:$0xf]
    %v1012 = vld [vmem:[%s998 + $0x34] sm:$0xf]
    %v1013 = vld [vmem:[%s998 + $0x38] sm:$0xf]
    %v1014 = vld [vmem:[%s998 + $0x3c] sm:$0xf]
    %v1031 = vunpack.c.l.b16 %v965
    %v1032 = vunpack.c.l.b16 %v966
    %v1033 = vunpack.c.l.b16 %v967
    %v1034 = vunpack.c.l.b16 %v968
    %v1035 = vunpack.c.l.b16 %v969
    %v1036 = vunpack.c.l.b16 %v970
    %v1037 = vunpack.c.l.b16 %v971
    %v1038 = vunpack.c.l.b16 %v972
    %v1039 = vunpack.c.l.b16 %v973
    %v1040 = vunpack.c.l.b16 %v974
    %v1041 = vunpack.c.l.b16 %v975
    %v1042 = vunpack.c.l.b16 %v976
    %v1043 = vunpack.c.l.b16 %v977
    %v1044 = vunpack.c.l.b16 %v978
    %v1045 = vunpack.c.l.b16 %v979
    %v1046 = vunpack.c.l.b16 %v980
    %v1047 = vpack.c.b16 %v1032, %v1031
    %v1048 = vpack.c.b16 %v1034, %v1033
    %v1049 = vpack.c.b16 %v1036, %v1035
    %v1050 = vpack.c.b16 %v1038, %v1037
    %v1051 = vpack.c.b16 %v1040, %v1039
    %v1052 = vpack.c.b16 %v1042, %v1041
    %v1053 = vpack.c.b16 %v1044, %v1043
    %v1054 = vpack.c.b16 %v1046, %v1045
    %1063 = vmatprep.subr.bf16.mxu0 0
    %1064 = vmatpush1.bf16.msra.mxu0 %v1047
    %1065 = vmatprep.subr.bf16.mxu0 0
    %1066 = vmatpush1.bf16.msra.mxu0 %v1048
    %1067 = vmatprep.subr.bf16.mxu0 0
    %1068 = vmatpush1.bf16.msra.mxu0 %v1049
    %1069 = vmatprep.subr.bf16.mxu0 0
    %1070 = vmatpush1.bf16.msra.mxu0 %v1050
    %1071 = vmatprep.subr.bf16.mxu0 0
    %1072 = vmatpush1.bf16.msra.mxu0 %v1051
    %1073 = vmatprep.subr.bf16.mxu0 0
    %1074 = vmatpush1.bf16.msra.mxu0 %v1052
    %1075 = vmatprep.subr.bf16.mxu0 0
    %1076 = vmatpush1.bf16.msra.mxu0 %v1053
    %1077 = vmatprep.subr.bf16.mxu0 0
    %1078 = vmatpush1.bf16.msra.mxu0 %v1054
    %1079 = vmatprep.subr.bf16.mxu0 0
    %1080 = vmatpush1.bf16.msra.mxu0 0
    %1081 = vmatprep.subr.bf16.mxu0 0
    %1082 = vmatpush1.bf16.msra.mxu0 0
    %1083 = vmatprep.subr.bf16.mxu0 0
    %1084 = vmatpush1.bf16.msra.mxu0 0
    %1085 = vmatprep.subr.bf16.mxu0 0
    %1086 = vmatpush1.bf16.msra.mxu0 0
    %1087 = vmatprep.subr.bf16.mxu0 0
    %1088 = vmatpush1.bf16.msra.mxu0 0
    %1089 = vmatprep.subr.bf16.mxu0 0
    %1090 = vmatpush1.bf16.msra.mxu0 0
    %1091 = vmatprep.subr.bf16.mxu0 0
    %1092 = vmatpush1.bf16.msra.mxu0 0
    %1093 = vmatprep.subr.bf16.mxu0 0
    %1094 = vmatpush1.bf16.msra.mxu0 0
    %1095 = vmatprep.mubr.bf16.mxu0 0
    %1096 = vmatmul.mubr.bf16.gmra.mrb[0].mxu0 %v963
    %v1097 = vpop.f32.mrb[0].mxu0
    %v1098 = vadd.f32 0.0, %v1097
    %v1099 = vpop.f32.mrb[0].mxu0
    %v1100 = vpop.f32.mrb[0].mxu0
    %v1101 = vadd.f32 0.0, %v1100
    %v1102 = vpop.f32.mrb[0].mxu0
    %1103 = vdwg.mxu0
    %v1104 = vpack.c.bf16 %v1101, %v1098
    %s1105 = scalar_lea.vmem [#allocation10], 32
    %v1106 = vld [vmem:[%s1105] sm:$0xff]
    %v1107 = vld [vmem:[%s1105 + $0x8] sm:$0xff]
    %1108 = vmatprep.subr.bf16.mxu0 0
    %1109 = vmatpush1.bf16.msra.mxu0 %v1104
    %1110 = vmatprep.subr.bf16.mxu0 0
    %1111 = vmatpush1.bf16.msra.mxu0 0
    %1112 = vmatprep.subr.bf16.mxu0 0
    %1113 = vmatpush1.bf16.msra.mxu0 0
    %1114 = vmatprep.subr.bf16.mxu0 0
    %1115 = vmatpush1.bf16.msra.mxu0 0
    %1116 = vmatprep.subr.bf16.mxu0 0
    %1117 = vmatpush1.bf16.msra.mxu0 0
    %1118 = vmatprep.subr.bf16.mxu0 0
    %1119 = vmatpush1.bf16.msra.mxu0 0
    %1120 = vmatprep.subr.bf16.mxu0 0
    %1121 = vmatpush1.bf16.msra.mxu0 0
    %1122 = vmatprep.subr.bf16.mxu0 0
    %1123 = vmatpush1.bf16.msra.mxu0 0
    %1124 = vmatprep.subr.bf16.mxu0 0
    %1125 = vmatpush1.bf16.msra.mxu0 0
    %1126 = vmatprep.subr.bf16.mxu0 0
    %1127 = vmatpush1.bf16.msra.mxu0 0
    %1128 = vmatprep.subr.bf16.mxu0 0
    %1129 = vmatpush1.bf16.msra.mxu0 0
    %1130 = vmatprep.subr.bf16.mxu0 0
    %1131 = vmatpush1.bf16.msra.mxu0 0
    %1132 = vmatprep.subr.bf16.mxu0 0
    %1133 = vmatpush1.bf16.msra.mxu0 0
    %1134 = vmatprep.subr.bf16.mxu0 0
    %1135 = vmatpush1.bf16.msra.mxu0 0
    %1136 = vmatprep.subr.bf16.mxu0 0
    %1137 = vmatpush1.bf16.msra.mxu0 0
    %1138 = vmatprep.subr.bf16.mxu0 0
    %1139 = vmatpush1.bf16.msra.mxu0 0
    %1140 = vmatprep.mubr.bf16.mxu0 0
    %1141 = vmatmul.mubr.bf16.gmra.mrb[0].mxu0 %v249
    %v1142 = vpop.f32.mrb[0].mxu0
    %v1143 = vadd.f32 %v1106, %v1142
    %v1144 = vpop.f32.mrb[0].mxu0
    %v1145 = vpop.f32.mrb[0].mxu0
    %v1146 = vadd.f32 %v1107, %v1145
    %v1147 = vpop.f32.mrb[0].mxu0
    %1148 = vdwg.mxu0
    %vm1149 = vcmp.ge.f32.partialorder %v1143, 0.0
    %vm1150 = vcmp.ge.f32.partialorder %v1146, 0.0
    %v1151 = vmul.f32 %v1143, 0.01
    %v1152 = vmul.f32 %v1146, 0.01
    %v1153 = vsel %vm1149, %v1143, %v1151
    %v1154 = vsel %vm1150, %v1146, %v1152
    %v1155 = vpack.c.bf16 %v1154, %v1153
    %1156 = vmatprep.subr.bf16.mxu0 0
    %1157 = vmatpush1.bf16.msra.mxu0 %v1155
    %1158 = vmatprep.subr.bf16.mxu0 0
    %1159 = vmatpush1.bf16.msra.mxu0 0
    %1160 = vmatprep.subr.bf16.mxu0 0
    %1161 = vmatpush1.bf16.msra.mxu0 0
    %1162 = vmatprep.subr.bf16.mxu0 0
    %1163 = vmatpush1.bf16.msra.mxu0 0
    %1164 = vmatprep.subr.bf16.mxu0 0
    %1165 = vmatpush1.bf16.msra.mxu0 0
    %1166 = vmatprep.subr.bf16.mxu0 0
    %1167 = vmatpush1.bf16.msra.mxu0 0
    %1168 = vmatprep.subr.bf16.mxu0 0
    %1169 = vmatpush1.bf16.msra.mxu0 0
    %1170 = vmatprep.subr.bf16.mxu0 0
    %1171 = vmatpush1.bf16.msra.mxu0 0
    %1172 = vmatprep.subr.bf16.mxu0 0
    %1173 = vmatpush1.bf16.msra.mxu0 0
    %1174 = vmatprep.subr.bf16.mxu0 0
    %1175 = vmatpush1.bf16.msra.mxu0 0
    %1176 = vmatprep.subr.bf16.mxu0 0
    %1177 = vmatpush1.bf16.msra.mxu0 0
    %1178 = vmatprep.subr.bf16.mxu0 0
    %1179 = vmatpush1.bf16.msra.mxu0 0
    %1180 = vmatprep.subr.bf16.mxu0 0
    %1181 = vmatpush1.bf16.msra.mxu0 0
    %1182 = vmatprep.subr.bf16.mxu0 0
    %1183 = vmatpush1.bf16.msra.mxu0 0
    %1184 = vmatprep.subr.bf16.mxu0 0
    %1185 = vmatpush1.bf16.msra.mxu0 0
    %1186 = vmatprep.subr.bf16.mxu0 0
    %1187 = vmatpush1.bf16.msra.mxu0 0
    %1188 = vmatprep.mubr.bf16.mxu0 0
    %1189 = vmatmul.mubr.bf16.gmra.mrb[0].mxu0 %v305
    %v1190 = vpop.f32.mrb[0].mxu0
    %v1191 = vadd.f32 0.0, %v1190
    %v1192 = vpop.f32.mrb[0].mxu0
    %v1193 = vpop.f32.mrb[0].mxu0
    %v1194 = vadd.f32 0.0, %v1193
    %v1195 = vpop.f32.mrb[0].mxu0
    %1196 = vdwg.mxu0
    %v1197 = vpack.c.bf16 %v1194, %v1191
    %v1214 = vunpack.c.l.b16 %v999
    %v1215 = vunpack.c.l.b16 %v1000
    %v1216 = vunpack.c.l.b16 %v1001
    %v1217 = vunpack.c.l.b16 %v1002
    %v1218 = vunpack.c.l.b16 %v1003
    %v1219 = vunpack.c.l.b16 %v1004
    %v1220 = vunpack.c.l.b16 %v1005
    %v1221 = vunpack.c.l.b16 %v1006
    %v1222 = vunpack.c.l.b16 %v1007
    %v1223 = vunpack.c.l.b16 %v1008
    %v1224 = vunpack.c.l.b16 %v1009
    %v1225 = vunpack.c.l.b16 %v1010
    %v1226 = vunpack.c.l.b16 %v1011
    %v1227 = vunpack.c.l.b16 %v1012
    %v1228 = vunpack.c.l.b16 %v1013
    %v1229 = vunpack.c.l.b16 %v1014
    %v1230 = vpack.c.b16 %v1215, %v1214
    %v1231 = vpack.c.b16 %v1217, %v1216
    %v1232 = vpack.c.b16 %v1219, %v1218
    %v1233 = vpack.c.b16 %v1221, %v1220
    %v1234 = vpack.c.b16 %v1223, %v1222
    %v1235 = vpack.c.b16 %v1225, %v1224
    %v1236 = vpack.c.b16 %v1227, %v1226
    %v1237 = vpack.c.b16 %v1229, %v1228
    %1246 = vmatprep.subr.bf16.mxu0 0
    %1247 = vmatpush1.bf16.msra.mxu0 %v1230
    %1248 = vmatprep.subr.bf16.mxu0 0
    %1249 = vmatpush1.bf16.msra.mxu0 %v1231
    %1250 = vmatprep.subr.bf16.mxu0 0
    %1251 = vmatpush1.bf16.msra.mxu0 %v1232
    %1252 = vmatprep.subr.bf16.mxu0 0
    %1253 = vmatpush1.bf16.msra.mxu0 %v1233
    %1254 = vmatprep.subr.bf16.mxu0 0
    %1255 = vmatpush1.bf16.msra.mxu0 %v1234
    %1256 = vmatprep.subr.bf16.mxu0 0
    %1257 = vmatpush1.bf16.msra.mxu0 %v1235
    %1258 = vmatprep.subr.bf16.mxu0 0
    %1259 = vmatpush1.bf16.msra.mxu0 %v1236
    %1260 = vmatprep.subr.bf16.mxu0 0
    %1261 = vmatpush1.bf16.msra.mxu0 %v1237
    %1262 = vmatprep.subr.bf16.mxu0 0
    %1263 = vmatpush1.bf16.msra.mxu0 0
    %1264 = vmatprep.subr.bf16.mxu0 0
    %1265 = vmatpush1.bf16.msra.mxu0 0
    %1266 = vmatprep.subr.bf16.mxu0 0
    %1267 = vmatpush1.bf16.msra.mxu0 0
    %1268 = vmatprep.subr.bf16.mxu0 0
    %1269 = vmatpush1.bf16.msra.mxu0 0
    %1270 = vmatprep.subr.bf16.mxu0 0
    %1271 = vmatpush1.bf16.msra.mxu0 0
    %1272 = vmatprep.subr.bf16.mxu0 0
    %1273 = vmatpush1.bf16.msra.mxu0 0
    %1274 = vmatprep.subr.bf16.mxu0 0
    %1275 = vmatpush1.bf16.msra.mxu0 0
    %1276 = vmatprep.subr.bf16.mxu0 0
    %1277 = vmatpush1.bf16.msra.mxu0 0
    %1278 = vmatprep.mubr.bf16.mxu0 0
    %1279 = vmatmul.mubr.bf16.gmra.mrb[0].mxu0 %v1197
    %v1280 = vpop.f32.mrb[0].mxu0
    %v1281 = vadd.f32 0.0, %v1280
    %v1282 = vpop.f32.mrb[0].mxu0
    %v1283 = vpop.f32.mrb[0].mxu0
    %v1284 = vadd.f32 0.0, %v1283
    %v1285 = vpop.f32.mrb[0].mxu0
    %1286 = vdwg.mxu0
    %v1303 = vunpack.c.l.b16 %v982
    %v1304 = vunpack.c.l.b16 %v983
    %v1305 = vunpack.c.l.b16 %v984
    %v1306 = vunpack.c.l.b16 %v985
    %v1307 = vunpack.c.l.b16 %v986
    %v1308 = vunpack.c.l.b16 %v987
    %v1309 = vunpack.c.l.b16 %v988
    %v1310 = vunpack.c.l.b16 %v989
    %v1311 = vunpack.c.l.b16 %v990
    %v1312 = vunpack.c.l.b16 %v991
    %v1313 = vunpack.c.l.b16 %v992
    %v1314 = vunpack.c.l.b16 %v993
    %v1315 = vunpack.c.l.b16 %v994
    %v1316 = vunpack.c.l.b16 %v995
    %v1317 = vunpack.c.l.b16 %v996
    %v1318 = vunpack.c.l.b16 %v997
    %v1319 = vpack.c.b16 %v1304, %v1303
    %v1320 = vpack.c.b16 %v1306, %v1305
    %v1321 = vpack.c.b16 %v1308, %v1307
    %v1322 = vpack.c.b16 %v1310, %v1309
    %v1323 = vpack.c.b16 %v1312, %v1311
    %v1324 = vpack.c.b16 %v1314, %v1313
    %v1325 = vpack.c.b16 %v1316, %v1315
    %v1326 = vpack.c.b16 %v1318, %v1317
    %1335 = vmatprep.subr.bf16.mxu0 0
    %1336 = vmatpush1.bf16.msra.mxu0 %v1319
    %1337 = vmatprep.subr.bf16.mxu0 0
    %1338 = vmatpush1.bf16.msra.mxu0 %v1320
    %1339 = vmatprep.subr.bf16.mxu0 0
    %1340 = vmatpush1.bf16.msra.mxu0 %v1321
    %1341 = vmatprep.subr.bf16.mxu0 0
    %1342 = vmatpush1.bf16.msra.mxu0 %v1322
    %1343 = vmatprep.subr.bf16.mxu0 0
    %1344 = vmatpush1.bf16.msra.mxu0 %v1323
    %1345 = vmatprep.subr.bf16.mxu0 0
    %1346 = vmatpush1.bf16.msra.mxu0 %v1324
    %1347 = vmatprep.subr.bf16.mxu0 0
    %1348 = vmatpush1.bf16.msra.mxu0 %v1325
    %1349 = vmatprep.subr.bf16.mxu0 0
    %1350 = vmatpush1.bf16.msra.mxu0 %v1326
    %1351 = vmatprep.subr.bf16.mxu0 0
    %1352 = vmatpush1.bf16.msra.mxu0 0
    %1353 = vmatprep.subr.bf16.mxu0 0
    %1354 = vmatpush1.bf16.msra.mxu0 0
    %1355 = vmatprep.subr.bf16.mxu0 0
    %1356 = vmatpush1.bf16.msra.mxu0 0
    %1357 = vmatprep.subr.bf16.mxu0 0
    %1358 = vmatpush1.bf16.msra.mxu0 0
    %1359 = vmatprep.subr.bf16.mxu0 0
    %1360 = vmatpush1.bf16.msra.mxu0 0
    %1361 = vmatprep.subr.bf16.mxu0 0
    %1362 = vmatpush1.bf16.msra.mxu0 0
    %1363 = vmatprep.subr.bf16.mxu0 0
    %1364 = vmatpush1.bf16.msra.mxu0 0
    %1365 = vmatprep.subr.bf16.mxu0 0
    %1366 = vmatpush1.bf16.msra.mxu0 0
    %1367 = vmatprep.mubr.bf16.mxu0 0
    %1368 = vmatmul.mubr.bf16.gmra.mrb[0].mxu0 %v963
    %v1369 = vpop.f32.mrb[0].mxu0
    %v1370 = vadd.f32 %v1281, %v1369
    %v1371 = vpop.f32.mrb[0].mxu0
    %v1372 = vpop.f32.mrb[0].mxu0
    %v1373 = vadd.f32 %v1284, %v1372
    %v1374 = vpop.f32.mrb[0].mxu0
    %1375 = vdwg.mxu0
    %s1376 = scalar_lea.vmem %s5, 2
    %v1377 = vld [vmem:[%s1376] sm:$0x1]
    %v1379 = vlaneseq
    %v1380 = vshrl.u32 %v1379, 7
    %v1381 = vsub.s32 0, %v1380
    %v1382 = vrot.slane %v1377, %v1381
    %v1384 = vadd.f32 %v1370, %v1382
    %v1385 = vadd.f32 %v1373, %v1382
    %v1386 = vmax.f32 %v1384, 0.0
    %v1387 = vmax.f32 %v1385, 0.0
    %v1388 = vpack.c.bf16 %v1387, %v1386
    %s1389 = scalar_lea.vmem [#allocation8], 576
    %v1390 = vld [vmem:[%s1389] sm:$0xf]
    %v1391 = vld [vmem:[%s1389 + $0x4] sm:$0xf]
    %v1392 = vld [vmem:[%s1389 + $0x8] sm:$0xf]
    %v1393 = vld [vmem:[%s1389 + $0xc] sm:$0xf]
    %v1394 = vld [vmem:[%s1389 + $0x10] sm:$0xf]
    %v1395 = vld [vmem:[%s1389 + $0x14] sm:$0xf]
    %v1396 = vld [vmem:[%s1389 + $0x18] sm:$0xf]
    %v1397 = vld [vmem:[%s1389 + $0x1c] sm:$0xf]
    %v1398 = vld [vmem:[%s1389 + $0x20] sm:$0xf]
    %v1399 = vld [vmem:[%s1389 + $0x24] sm:$0xf]
    %v1400 = vld [vmem:[%s1389 + $0x28] sm:$0xf]
    %v1401 = vld [vmem:[%s1389 + $0x2c] sm:$0xf]
    %v1402 = vld [vmem:[%s1389 + $0x30] sm:$0xf]
    %v1403 = vld [vmem:[%s1389 + $0x34] sm:$0xf]
    %v1404 = vld [vmem:[%s1389 + $0x38] sm:$0xf]
    %v1405 = vld [vmem:[%s1389 + $0x3c] sm:$0xf]
    %s1406 = scalar_lea.vmem [#allocation8], 640
    %v1407 = vld [vmem:[%s1406] sm:$0xf]
    %v1408 = vld [vmem:[%s1406 + $0x4] sm:$0xf]
    %v1409 = vld [vmem:[%s1406 + $0x8] sm:$0xf]
    %v1410 = vld [vmem:[%s1406 + $0xc] sm:$0xf]
    %v1411 = vld [vmem:[%s1406 + $0x10] sm:$0xf]
    %v1412 = vld [vmem:[%s1406 + $0x14] sm:$0xf]
    %v1413 = vld [vmem:[%s1406 + $0x18] sm:$0xf]
    %v1414 = vld [vmem:[%s1406 + $0x1c] sm:$0xf]
    %v1415 = vld [vmem:[%s1406 + $0x20] sm:$0xf]
    %v1416 = vld [vmem:[%s1406 + $0x24] sm:$0xf]
    %v1417 = vld [vmem:[%s1406 + $0x28] sm:$0xf]
    %v1418 = vld [vmem:[%s1406 + $0x2c] sm:$0xf]
    %v1419 = vld [vmem:[%s1406 + $0x30] sm:$0xf]
    %v1420 = vld [vmem:[%s1406 + $0x34] sm:$0xf]
    %v1421 = vld [vmem:[%s1406 + $0x38] sm:$0xf]
    %v1422 = vld [vmem:[%s1406 + $0x3c] sm:$0xf]
    %s1423 = scalar_lea.vmem [#allocation8], 704
    %v1424 = vld [vmem:[%s1423] sm:$0xf]
    %v1425 = vld [vmem:[%s1423 + $0x4] sm:$0xf]
    %v1426 = vld [vmem:[%s1423 + $0x8] sm:$0xf]
    %v1427 = vld [vmem:[%s1423 + $0xc] sm:$0xf]
    %v1428 = vld [vmem:[%s1423 + $0x10] sm:$0xf]
    %v1429 = vld [vmem:[%s1423 + $0x14] sm:$0xf]
    %v1430 = vld [vmem:[%s1423 + $0x18] sm:$0xf]
    %v1431 = vld [vmem:[%s1423 + $0x1c] sm:$0xf]
    %v1432 = vld [vmem:[%s1423 + $0x20] sm:$0xf]
    %v1433 = vld [vmem:[%s1423 + $0x24] sm:$0xf]
    %v1434 = vld [vmem:[%s1423 + $0x28] sm:$0xf]
    %v1435 = vld [vmem:[%s1423 + $0x2c] sm:$0xf]
    %v1436 = vld [vmem:[%s1423 + $0x30] sm:$0xf]
    %v1437 = vld [vmem:[%s1423 + $0x34] sm:$0xf]
    %v1438 = vld [vmem:[%s1423 + $0x38] sm:$0xf]
    %v1439 = vld [vmem:[%s1423 + $0x3c] sm:$0xf]
    %v1456 = vunpack.c.l.b16 %v1390
    %v1457 = vunpack.c.l.b16 %v1391
    %v1458 = vunpack.c.l.b16 %v1392
    %v1459 = vunpack.c.l.b16 %v1393
    %v1460 = vunpack.c.l.b16 %v1394
    %v1461 = vunpack.c.l.b16 %v1395
    %v1462 = vunpack.c.l.b16 %v1396
    %v1463 = vunpack.c.l.b16 %v1397
    %v1464 = vunpack.c.l.b16 %v1398
    %v1465 = vunpack.c.l.b16 %v1399
    %v1466 = vunpack.c.l.b16 %v1400
    %v1467 = vunpack.c.l.b16 %v1401
    %v1468 = vunpack.c.l.b16 %v1402
    %v1469 = vunpack.c.l.b16 %v1403
    %v1470 = vunpack.c.l.b16 %v1404
    %v1471 = vunpack.c.l.b16 %v1405
    %v1472 = vpack.c.b16 %v1457, %v1456
    %v1473 = vpack.c.b16 %v1459, %v1458
    %v1474 = vpack.c.b16 %v1461, %v1460
    %v1475 = vpack.c.b16 %v1463, %v1462
    %v1476 = vpack.c.b16 %v1465, %v1464
    %v1477 = vpack.c.b16 %v1467, %v1466
    %v1478 = vpack.c.b16 %v1469, %v1468
    %v1479 = vpack.c.b16 %v1471, %v1470
    %1488 = vmatprep.subr.bf16.mxu0 0
    %1489 = vmatpush1.bf16.msra.mxu0 %v1472
    %1490 = vmatprep.subr.bf16.mxu0 0
    %1491 = vmatpush1.bf16.msra.mxu0 %v1473
    %1492 = vmatprep.subr.bf16.mxu0 0
    %1493 = vmatpush1.bf16.msra.mxu0 %v1474
    %1494 = vmatprep.subr.bf16.mxu0 0
    %1495 = vmatpush1.bf16.msra.mxu0 %v1475
    %1496 = vmatprep.subr.bf16.mxu0 0
    %1497 = vmatpush1.bf16.msra.mxu0 %v1476
    %1498 = vmatprep.subr.bf16.mxu0 0
    %1499 = vmatpush1.bf16.msra.mxu0 %v1477
    %1500 = vmatprep.subr.bf16.mxu0 0
    %1501 = vmatpush1.bf16.msra.mxu0 %v1478
    %1502 = vmatprep.subr.bf16.mxu0 0
    %1503 = vmatpush1.bf16.msra.mxu0 %v1479
    %1504 = vmatprep.subr.bf16.mxu0 0
    %1505 = vmatpush1.bf16.msra.mxu0 0
    %1506 = vmatprep.subr.bf16.mxu0 0
    %1507 = vmatpush1.bf16.msra.mxu0 0
    %1508 = vmatprep.subr.bf16.mxu0 0
    %1509 = vmatpush1.bf16.msra.mxu0 0
    %1510 = vmatprep.subr.bf16.mxu0 0
    %1511 = vmatpush1.bf16.msra.mxu0 0
    %1512 = vmatprep.subr.bf16.mxu0 0
    %1513 = vmatpush1.bf16.msra.mxu0 0
    %1514 = vmatprep.subr.bf16.mxu0 0
    %1515 = vmatpush1.bf16.msra.mxu0 0
    %1516 = vmatprep.subr.bf16.mxu0 0
    %1517 = vmatpush1.bf16.msra.mxu0 0
    %1518 = vmatprep.subr.bf16.mxu0 0
    %1519 = vmatpush1.bf16.msra.mxu0 0
    %1520 = vmatprep.mubr.bf16.mxu0 0
    %1521 = vmatmul.mubr.bf16.gmra.mrb[0].mxu0 %v1388
    %v1522 = vpop.f32.mrb[0].mxu0
    %v1523 = vadd.f32 0.0, %v1522
    %v1524 = vpop.f32.mrb[0].mxu0
    %v1525 = vpop.f32.mrb[0].mxu0
    %v1526 = vadd.f32 0.0, %v1525
    %v1527 = vpop.f32.mrb[0].mxu0
    %1528 = vdwg.mxu0
    %v1529 = vpack.c.bf16 %v1526, %v1523
    %s1530 = scalar_lea.vmem [#allocation10], 48
    %v1531 = vld [vmem:[%s1530] sm:$0xff]
    %v1532 = vld [vmem:[%s1530 + $0x8] sm:$0xff]
    %1533 = vmatprep.subr.bf16.mxu0 0
    %1534 = vmatpush1.bf16.msra.mxu0 %v1529
    %1535 = vmatprep.subr.bf16.mxu0 0
    %1536 = vmatpush1.bf16.msra.mxu0 0
    %1537 = vmatprep.subr.bf16.mxu0 0
    %1538 = vmatpush1.bf16.msra.mxu0 0
    %1539 = vmatprep.subr.bf16.mxu0 0
    %1540 = vmatpush1.bf16.msra.mxu0 0
    %1541 = vmatprep.subr.bf16.mxu0 0
    %1542 = vmatpush1.bf16.msra.mxu0 0
    %1543 = vmatprep.subr.bf16.mxu0 0
    %1544 = vmatpush1.bf16.msra.mxu0 0
    %1545 = vmatprep.subr.bf16.mxu0 0
    %1546 = vmatpush1.bf16.msra.mxu0 0
    %1547 = vmatprep.subr.bf16.mxu0 0
    %1548 = vmatpush1.bf16.msra.mxu0 0
    %1549 = vmatprep.subr.bf16.mxu0 0
    %1550 = vmatpush1.bf16.msra.mxu0 0
    %1551 = vmatprep.subr.bf16.mxu0 0
    %1552 = vmatpush1.bf16.msra.mxu0 0
    %1553 = vmatprep.subr.bf16.mxu0 0
    %1554 = vmatpush1.bf16.msra.mxu0 0
    %1555 = vmatprep.subr.bf16.mxu0 0
    %1556 = vmatpush1.bf16.msra.mxu0 0
    %1557 = vmatprep.subr.bf16.mxu0 0
    %1558 = vmatpush1.bf16.msra.mxu0 0
    %1559 = vmatprep.subr.bf16.mxu0 0
    %1560 = vmatpush1.bf16.msra.mxu0 0
    %1561 = vmatprep.subr.bf16.mxu0 0
    %1562 = vmatpush1.bf16.msra.mxu0 0
    %1563 = vmatprep.subr.bf16.mxu0 0
    %1564 = vmatpush1.bf16.msra.mxu0 0
    %1565 = vmatprep.mubr.bf16.mxu0 0
    %1566 = vmatmul.mubr.bf16.gmra.mrb[0].mxu0 %v249
    %v1567 = vpop.f32.mrb[0].mxu0
    %v1568 = vadd.f32 %v1531, %v1567
    %v1569 = vpop.f32.mrb[0].mxu0
    %v1570 = vpop.f32.mrb[0].mxu0
    %v1571 = vadd.f32 %v1532, %v1570
    %v1572 = vpop.f32.mrb[0].mxu0
    %1573 = vdwg.mxu0
    %vm1574 = vcmp.ge.f32.partialorder %v1568, 0.0
    %vm1575 = vcmp.ge.f32.partialorder %v1571, 0.0
    %v1576 = vmul.f32 %v1568, 0.01
    %v1577 = vmul.f32 %v1571, 0.01
    %v1578 = vsel %vm1574, %v1568, %v1576
    %v1579 = vsel %vm1575, %v1571, %v1577
    %v1580 = vpack.c.bf16 %v1579, %v1578
    %1581 = vmatprep.subr.bf16.mxu0 0
    %1582 = vmatpush1.bf16.msra.mxu0 %v1580
    %1583 = vmatprep.subr.bf16.mxu0 0
    %1584 = vmatpush1.bf16.msra.mxu0 0
    %1585 = vmatprep.subr.bf16.mxu0 0
    %1586 = vmatpush1.bf16.msra.mxu0 0
    %1587 = vmatprep.subr.bf16.mxu0 0
    %1588 = vmatpush1.bf16.msra.mxu0 0
    %1589 = vmatprep.subr.bf16.mxu0 0
    %1590 = vmatpush1.bf16.msra.mxu0 0
    %1591 = vmatprep.subr.bf16.mxu0 0
    %1592 = vmatpush1.bf16.msra.mxu0 0
    %1593 = vmatprep.subr.bf16.mxu0 0
    %1594 = vmatpush1.bf16.msra.mxu0 0
    %1595 = vmatprep.subr.bf16.mxu0 0
    %1596 = vmatpush1.bf16.msra.mxu0 0
    %1597 = vmatprep.subr.bf16.mxu0 0
    %1598 = vmatpush1.bf16.msra.mxu0 0
    %1599 = vmatprep.subr.bf16.mxu0 0
    %1600 = vmatpush1.bf16.msra.mxu0 0
    %1601 = vmatprep.subr.bf16.mxu0 0
    %1602 = vmatpush1.bf16.msra.mxu0 0
    %1603 = vmatprep.subr.bf16.mxu0 0
    %1604 = vmatpush1.bf16.msra.mxu0 0
    %1605 = vmatprep.subr.bf16.mxu0 0
    %1606 = vmatpush1.bf16.msra.mxu0 0
    %1607 = vmatprep.subr.bf16.mxu0 0
    %1608 = vmatpush1.bf16.msra.mxu0 0
    %1609 = vmatprep.subr.bf16.mxu0 0
    %1610 = vmatpush1.bf16.msra.mxu0 0
    %1611 = vmatprep.subr.bf16.mxu0 0
    %1612 = vmatpush1.bf16.msra.mxu0 0
    %1613 = vmatprep.mubr.bf16.mxu0 0
    %1614 = vmatmul.mubr.bf16.gmra.mrb[0].mxu0 %v305
    %v1615 = vpop.f32.mrb[0].mxu0
    %v1616 = vadd.f32 0.0, %v1615
    %v1617 = vpop.f32.mrb[0].mxu0
    %v1618 = vpop.f32.mrb[0].mxu0
    %v1619 = vadd.f32 0.0, %v1618
    %v1620 = vpop.f32.mrb[0].mxu0
    %1621 = vdwg.mxu0
    %v1622 = vpack.c.bf16 %v1619, %v1616
    %v1639 = vunpack.c.l.b16 %v1424
    %v1640 = vunpack.c.l.b16 %v1425
    %v1641 = vunpack.c.l.b16 %v1426
    %v1642 = vunpack.c.l.b16 %v1427
    %v1643 = vunpack.c.l.b16 %v1428
    %v1644 = vunpack.c.l.b16 %v1429
    %v1645 = vunpack.c.l.b16 %v1430
    %v1646 = vunpack.c.l.b16 %v1431
    %v1647 = vunpack.c.l.b16 %v1432
    %v1648 = vunpack.c.l.b16 %v1433
    %v1649 = vunpack.c.l.b16 %v1434
    %v1650 = vunpack.c.l.b16 %v1435
    %v1651 = vunpack.c.l.b16 %v1436
    %v1652 = vunpack.c.l.b16 %v1437
    %v1653 = vunpack.c.l.b16 %v1438
    %v1654 = vunpack.c.l.b16 %v1439
    %v1655 = vpack.c.b16 %v1640, %v1639
    %v1656 = vpack.c.b16 %v1642, %v1641
    %v1657 = vpack.c.b16 %v1644, %v1643
    %v1658 = vpack.c.b16 %v1646, %v1645
    %v1659 = vpack.c.b16 %v1648, %v1647
    %v1660 = vpack.c.b16 %v1650, %v1649
    %v1661 = vpack.c.b16 %v1652, %v1651
    %v1662 = vpack.c.b16 %v1654, %v1653
    %1671 = vmatprep.subr.bf16.mxu0 0
    %1672 = vmatpush1.bf16.msra.mxu0 %v1655
    %1673 = vmatprep.subr.bf16.mxu0 0
    %1674 = vmatpush1.bf16.msra.mxu0 %v1656
    %1675 = vmatprep.subr.bf16.mxu0 0
    %1676 = vmatpush1.bf16.msra.mxu0 %v1657
    %1677 = vmatprep.subr.bf16.mxu0 0
    %1678 = vmatpush1.bf16.msra.mxu0 %v1658
    %1679 = vmatprep.subr.bf16.mxu0 0
    %1680 = vmatpush1.bf16.msra.mxu0 %v1659
    %1681 = vmatprep.subr.bf16.mxu0 0
    %1682 = vmatpush1.bf16.msra.mxu0 %v1660
    %1683 = vmatprep.subr.bf16.mxu0 0
    %1684 = vmatpush1.bf16.msra.mxu0 %v1661
    %1685 = vmatprep.subr.bf16.mxu0 0
    %1686 = vmatpush1.bf16.msra.mxu0 %v1662
    %1687 = vmatprep.subr.bf16.mxu0 0
    %1688 = vmatpush1.bf16.msra.mxu0 0
    %1689 = vmatprep.subr.bf16.mxu0 0
    %1690 = vmatpush1.bf16.msra.mxu0 0
    %1691 = vmatprep.subr.bf16.mxu0 0
    %1692 = vmatpush1.bf16.msra.mxu0 0
    %1693 = vmatprep.subr.bf16.mxu0 0
    %1694 = vmatpush1.bf16.msra.mxu0 0
    %1695 = vmatprep.subr.bf16.mxu0 0
    %1696 = vmatpush1.bf16.msra.mxu0 0
    %1697 = vmatprep.subr.bf16.mxu0 0
    %1698 = vmatpush1.bf16.msra.mxu0 0
    %1699 = vmatprep.subr.bf16.mxu0 0
    %1700 = vmatpush1.bf16.msra.mxu0 0
    %1701 = vmatprep.subr.bf16.mxu0 0
    %1702 = vmatpush1.bf16.msra.mxu0 0
    %1703 = vmatprep.mubr.bf16.mxu0 0
    %1704 = vmatmul.mubr.bf16.gmra.mrb[0].mxu0 %v1622
    %v1705 = vpop.f32.mrb[0].mxu0
    %v1706 = vadd.f32 0.0, %v1705
    %v1707 = vpop.f32.mrb[0].mxu0
    %v1708 = vpop.f32.mrb[0].mxu0
    %v1709 = vadd.f32 0.0, %v1708
    %v1710 = vpop.f32.mrb[0].mxu0
    %1711 = vdwg.mxu0
    %v1728 = vunpack.c.l.b16 %v1407
    %v1729 = vunpack.c.l.b16 %v1408
    %v1730 = vunpack.c.l.b16 %v1409
    %v1731 = vunpack.c.l.b16 %v1410
    %v1732 = vunpack.c.l.b16 %v1411
    %v1733 = vunpack.c.l.b16 %v1412
    %v1734 = vunpack.c.l.b16 %v1413
    %v1735 = vunpack.c.l.b16 %v1414
    %v1736 = vunpack.c.l.b16 %v1415
    %v1737 = vunpack.c.l.b16 %v1416
    %v1738 = vunpack.c.l.b16 %v1417
    %v1739 = vunpack.c.l.b16 %v1418
    %v1740 = vunpack.c.l.b16 %v1419
    %v1741 = vunpack.c.l.b16 %v1420
    %v1742 = vunpack.c.l.b16 %v1421
    %v1743 = vunpack.c.l.b16 %v1422
    %v1744 = vpack.c.b16 %v1729, %v1728
    %v1745 = vpack.c.b16 %v1731, %v1730
    %v1746 = vpack.c.b16 %v1733, %v1732
    %v1747 = vpack.c.b16 %v1735, %v1734
    %v1748 = vpack.c.b16 %v1737, %v1736
    %v1749 = vpack.c.b16 %v1739, %v1738
    %v1750 = vpack.c.b16 %v1741, %v1740
    %v1751 = vpack.c.b16 %v1743, %v1742
    %1760 = vmatprep.subr.bf16.mxu0 0
    %1761 = vmatpush1.bf16.msra.mxu0 %v1744
    %1762 = vmatprep.subr.bf16.mxu0 0
    %1763 = vmatpush1.bf16.msra.mxu0 %v1745
    %1764 = vmatprep.subr.bf16.mxu0 0
    %1765 = vmatpush1.bf16.msra.mxu0 %v1746
    %1766 = vmatprep.subr.bf16.mxu0 0
    %1767 = vmatpush1.bf16.msra.mxu0 %v1747
    %1768 = vmatprep.subr.bf16.mxu0 0
    %1769 = vmatpush1.bf16.msra.mxu0 %v1748
    %1770 = vmatprep.subr.bf16.mxu0 0
    %1771 = vmatpush1.bf16.msra.mxu0 %v1749
    %1772 = vmatprep.subr.bf16.mxu0 0
    %1773 = vmatpush1.bf16.msra.mxu0 %v1750
    %1774 = vmatprep.subr.bf16.mxu0 0
    %1775 = vmatpush1.bf16.msra.mxu0 %v1751
    %1776 = vmatprep.subr.bf16.mxu0 0
    %1777 = vmatpush1.bf16.msra.mxu0 0
    %1778 = vmatprep.subr.bf16.mxu0 0
    %1779 = vmatpush1.bf16.msra.mxu0 0
    %1780 = vmatprep.subr.bf16.mxu0 0
    %1781 = vmatpush1.bf16.msra.mxu0 0
    %1782 = vmatprep.subr.bf16.mxu0 0
    %1783 = vmatpush1.bf16.msra.mxu0 0
    %1784 = vmatprep.subr.bf16.mxu0 0
    %1785 = vmatpush1.bf16.msra.mxu0 0
    %1786 = vmatprep.subr.bf16.mxu0 0
    %1787 = vmatpush1.bf16.msra.mxu0 0
    %1788 = vmatprep.subr.bf16.mxu0 0
    %1789 = vmatpush1.bf16.msra.mxu0 0
    %1790 = vmatprep.subr.bf16.mxu0 0
    %1791 = vmatpush1.bf16.msra.mxu0 0
    %1792 = vmatprep.mubr.bf16.mxu0 0
    %1793 = vmatmul.mubr.bf16.gmra.mrb[0].mxu0 %v1388
    %v1794 = vpop.f32.mrb[0].mxu0
    %v1795 = vadd.f32 %v1706, %v1794
    %v1796 = vpop.f32.mrb[0].mxu0
    %v1797 = vpop.f32.mrb[0].mxu0
    %v1798 = vadd.f32 %v1709, %v1797
    %v1799 = vpop.f32.mrb[0].mxu0
    %1800 = vdwg.mxu0
    %s1801 = scalar_lea.vmem %s5, 3
    %v1802 = vld [vmem:[%s1801] sm:$0x1]
    %v1804 = vlaneseq
    %v1805 = vshrl.u32 %v1804, 7
    %v1806 = vsub.s32 0, %v1805
    %v1807 = vrot.slane %v1802, %v1806
    %v1809 = vadd.f32 %v1795, %v1807
    %v1810 = vadd.f32 %v1798, %v1807
    %v1811 = vmax.f32 %v1809, 0.0
    %v1812 = vmax.f32 %v1810, 0.0
    %v1813 = vpack.c.bf16 %v1812, %v1811
    %s1814 = scalar_lea.vmem [#allocation8], 768
    %v1815 = vld [vmem:[%s1814] sm:$0xf]
    %v1816 = vld [vmem:[%s1814 + $0x4] sm:$0xf]
    %v1817 = vld [vmem:[%s1814 + $0x8] sm:$0xf]
    %v1818 = vld [vmem:[%s1814 + $0xc] sm:$0xf]
    %v1819 = vld [vmem:[%s1814 + $0x10] sm:$0xf]
    %v1820 = vld [vmem:[%s1814 + $0x14] sm:$0xf]
    %v1821 = vld [vmem:[%s1814 + $0x18] sm:$0xf]
    %v1822 = vld [vmem:[%s1814 + $0x1c] sm:$0xf]
    %v1823 = vld [vmem:[%s1814 + $0x20] sm:$0xf]
    %v1824 = vld [vmem:[%s1814 + $0x24] sm:$0xf]
    %v1825 = vld [vmem:[%s1814 + $0x28] sm:$0xf]
    %v1826 = vld [vmem:[%s1814 + $0x2c] sm:$0xf]
    %v1827 = vld [vmem:[%s1814 + $0x30] sm:$0xf]
    %v1828 = vld [vmem:[%s1814 + $0x34] sm:$0xf]
    %v1829 = vld [vmem:[%s1814 + $0x38] sm:$0xf]
    %v1830 = vld [vmem:[%s1814 + $0x3c] sm:$0xf]
    %s1831 = scalar_lea.vmem [#allocation8], 832
    %v1832 = vld [vmem:[%s1831] sm:$0xf]
    %v1833 = vld [vmem:[%s1831 + $0x4] sm:$0xf]
    %v1834 = vld [vmem:[%s1831 + $0x8] sm:$0xf]
    %v1835 = vld [vmem:[%s1831 + $0xc] sm:$0xf]
    %v1836 = vld [vmem:[%s1831 + $0x10] sm:$0xf]
    %v1837 = vld [vmem:[%s1831 + $0x14] sm:$0xf]
    %v1838 = vld [vmem:[%s1831 + $0x18] sm:$0xf]
    %v1839 = vld [vmem:[%s1831 + $0x1c] sm:$0xf]
    %v1840 = vld [vmem:[%s1831 + $0x20] sm:$0xf]
    %v1841 = vld [vmem:[%s1831 + $0x24] sm:$0xf]
    %v1842 = vld [vmem:[%s1831 + $0x28] sm:$0xf]
    %v1843 = vld [vmem:[%s1831 + $0x2c] sm:$0xf]
    %v1844 = vld [vmem:[%s1831 + $0x30] sm:$0xf]
    %v1845 = vld [vmem:[%s1831 + $0x34] sm:$0xf]
    %v1846 = vld [vmem:[%s1831 + $0x38] sm:$0xf]
    %v1847 = vld [vmem:[%s1831 + $0x3c] sm:$0xf]
    %s1848 = scalar_lea.vmem [#allocation8], 896
    %v1849 = vld [vmem:[%s1848] sm:$0xf]
    %v1850 = vld [vmem:[%s1848 + $0x4] sm:$0xf]
    %v1851 = vld [vmem:[%s1848 + $0x8] sm:$0xf]
    %v1852 = vld [vmem:[%s1848 + $0xc] sm:$0xf]
    %v1853 = vld [vmem:[%s1848 + $0x10] sm:$0xf]
    %v1854 = vld [vmem:[%s1848 + $0x14] sm:$0xf]
    %v1855 = vld [vmem:[%s1848 + $0x18] sm:$0xf]
    %v1856 = vld [vmem:[%s1848 + $0x1c] sm:$0xf]
    %v1857 = vld [vmem:[%s1848 + $0x20] sm:$0xf]
    %v1858 = vld [vmem:[%s1848 + $0x24] sm:$0xf]
    %v1859 = vld [vmem:[%s1848 + $0x28] sm:$0xf]
    %v1860 = vld [vmem:[%s1848 + $0x2c] sm:$0xf]
    %v1861 = vld [vmem:[%s1848 + $0x30] sm:$0xf]
    %v1862 = vld [vmem:[%s1848 + $0x34] sm:$0xf]
    %v1863 = vld [vmem:[%s1848 + $0x38] sm:$0xf]
    %v1864 = vld [vmem:[%s1848 + $0x3c] sm:$0xf]
    %v1881 = vunpack.c.l.b16 %v1815
    %v1882 = vunpack.c.l.b16 %v1816
    %v1883 = vunpack.c.l.b16 %v1817
    %v1884 = vunpack.c.l.b16 %v1818
    %v1885 = vunpack.c.l.b16 %v1819
    %v1886 = vunpack.c.l.b16 %v1820
    %v1887 = vunpack.c.l.b16 %v1821
    %v1888 = vunpack.c.l.b16 %v1822
    %v1889 = vunpack.c.l.b16 %v1823
    %v1890 = vunpack.c.l.b16 %v1824
    %v1891 = vunpack.c.l.b16 %v1825
    %v1892 = vunpack.c.l.b16 %v1826
    %v1893 = vunpack.c.l.b16 %v1827
    %v1894 = vunpack.c.l.b16 %v1828
    %v1895 = vunpack.c.l.b16 %v1829
    %v1896 = vunpack.c.l.b16 %v1830
    %v1897 = vpack.c.b16 %v1882, %v1881
    %v1898 = vpack.c.b16 %v1884, %v1883
    %v1899 = vpack.c.b16 %v1886, %v1885
    %v1900 = vpack.c.b16 %v1888, %v1887
    %v1901 = vpack.c.b16 %v1890, %v1889
    %v1902 = vpack.c.b16 %v1892, %v1891
    %v1903 = vpack.c.b16 %v1894, %v1893
    %v1904 = vpack.c.b16 %v1896, %v1895
    %1913 = vmatprep.subr.bf16.mxu0 0
    %1914 = vmatpush1.bf16.msra.mxu0 %v1897
    %1915 = vmatprep.subr.bf16.mxu0 0
    %1916 = vmatpush1.bf16.msra.mxu0 %v1898
    %1917 = vmatprep.subr.bf16.mxu0 0
    %1918 = vmatpush1.bf16.msra.mxu0 %v1899
    %1919 = vmatprep.subr.bf16.mxu0 0
    %1920 = vmatpush1.bf16.msra.mxu0 %v1900
    %1921 = vmatprep.subr.bf16.mxu0 0
    %1922 = vmatpush1.bf16.msra.mxu0 %v1901
    %1923 = vmatprep.subr.bf16.mxu0 0
    %1924 = vmatpush1.bf16.msra.mxu0 %v1902
    %1925 = vmatprep.subr.bf16.mxu0 0
    %1926 = vmatpush1.bf16.msra.mxu0 %v1903
    %1927 = vmatprep.subr.bf16.mxu0 0
    %1928 = vmatpush1.bf16.msra.mxu0 %v1904
    %1929 = vmatprep.subr.bf16.mxu0 0
    %1930 = vmatpush1.bf16.msra.mxu0 0
    %1931 = vmatprep.subr.bf16.mxu0 0
    %1932 = vmatpush1.bf16.msra.mxu0 0
    %1933 = vmatprep.subr.bf16.mxu0 0
    %1934 = vmatpush1.bf16.msra.mxu0 0
    %1935 = vmatprep.subr.bf16.mxu0 0
    %1936 = vmatpush1.bf16.msra.mxu0 0
    %1937 = vmatprep.subr.bf16.mxu0 0
    %1938 = vmatpush1.bf16.msra.mxu0 0
    %1939 = vmatprep.subr.bf16.mxu0 0
    %1940 = vmatpush1.bf16.msra.mxu0 0
    %1941 = vmatprep.subr.bf16.mxu0 0
    %1942 = vmatpush1.bf16.msra.mxu0 0
    %1943 = vmatprep.subr.bf16.mxu0 0
    %1944 = vmatpush1.bf16.msra.mxu0 0
    %1945 = vmatprep.mubr.bf16.mxu0 0
    %1946 = vmatmul.mubr.bf16.gmra.mrb[0].mxu0 %v1813
    %v1947 = vpop.f32.mrb[0].mxu0
    %v1948 = vadd.f32 0.0, %v1947
    %v1949 = vpop.f32.mrb[0].mxu0
    %v1950 = vpop.f32.mrb[0].mxu0
    %v1951 = vadd.f32 0.0, %v1950
    %v1952 = vpop.f32.mrb[0].mxu0
    %1953 = vdwg.mxu0
    %v1954 = vpack.c.bf16 %v1951, %v1948
    %s1955 = scalar_lea.vmem [#allocation10], 64
    %v1956 = vld [vmem:[%s1955] sm:$0xff]
    %v1957 = vld [vmem:[%s1955 + $0x8] sm:$0xff]
    %1958 = vmatprep.subr.bf16.mxu0 0
    %1959 = vmatpush1.bf16.msra.mxu0 %v1954
    %1960 = vmatprep.subr.bf16.mxu0 0
    %1961 = vmatpush1.bf16.msra.mxu0 0
    %1962 = vmatprep.subr.bf16.mxu0 0
    %1963 = vmatpush1.bf16.msra.mxu0 0
    %1964 = vmatprep.subr.bf16.mxu0 0
    %1965 = vmatpush1.bf16.msra.mxu0 0
    %1966 = vmatprep.subr.bf16.mxu0 0
    %1967 = vmatpush1.bf16.msra.mxu0 0
    %1968 = vmatprep.subr.bf16.mxu0 0
    %1969 = vmatpush1.bf16.msra.mxu0 0
    %1970 = vmatprep.subr.bf16.mxu0 0
    %1971 = vmatpush1.bf16.msra.mxu0 0
    %1972 = vmatprep.subr.bf16.mxu0 0
    %1973 = vmatpush1.bf16.msra.mxu0 0
    %1974 = vmatprep.subr.bf16.mxu0 0
    %1975 = vmatpush1.bf16.msra.mxu0 0
    %1976 = vmatprep.subr.bf16.mxu0 0
    %1977 = vmatpush1.bf16.msra.mxu0 0
    %1978 = vmatprep.subr.bf16.mxu0 0
    %1979 = vmatpush1.bf16.msra.mxu0 0
    %1980 = vmatprep.subr.bf16.mxu0 0
    %1981 = vmatpush1.bf16.msra.mxu0 0
    %1982 = vmatprep.subr.bf16.mxu0 0
    %1983 = vmatpush1.bf16.msra.mxu0 0
    %1984 = vmatprep.subr.bf16.mxu0 0
    %1985 = vmatpush1.bf16.msra.mxu0 0
    %1986 = vmatprep.subr.bf16.mxu0 0
    %1987 = vmatpush1.bf16.msra.mxu0 0
    %1988 = vmatprep.subr.bf16.mxu0 0
    %1989 = vmatpush1.bf16.msra.mxu0 0
    %1990 = vmatprep.mubr.bf16.mxu0 0
    %1991 = vmatmul.mubr.bf16.gmra.mrb[0].mxu0 %v249
    %v1992 = vpop.f32.mrb[0].mxu0
    %v1993 = vadd.f32 %v1956, %v1992
    %v1994 = vpop.f32.mrb[0].mxu0
    %v1995 = vpop.f32.mrb[0].mxu0
    %v1996 = vadd.f32 %v1957, %v1995
    %v1997 = vpop.f32.mrb[0].mxu0
    %1998 = vdwg.mxu0
    %vm1999 = vcmp.ge.f32.partialorder %v1993, 0.0
    %vm2000 = vcmp.ge.f32.partialorder %v1996, 0.0
    %v2001 = vmul.f32 %v1993, 0.01
    %v2002 = vmul.f32 %v1996, 0.01
    %v2003 = vsel %vm1999, %v1993, %v2001
    %v2004 = vsel %vm2000, %v1996, %v2002
    %v2005 = vpack.c.bf16 %v2004, %v2003
    %2006 = vmatprep.subr.bf16.mxu0 0
    %2007 = vmatpush1.bf16.msra.mxu0 %v2005
    %2008 = vmatprep.subr.bf16.mxu0 0
    %2009 = vmatpush1.bf16.msra.mxu0 0
    %2010 = vmatprep.subr.bf16.mxu0 0
    %2011 = vmatpush1.bf16.msra.mxu0 0
    %2012 = vmatprep.subr.bf16.mxu0 0
    %2013 = vmatpush1.bf16.msra.mxu0 0
    %2014 = vmatprep.subr.bf16.mxu0 0
    %2015 = vmatpush1.bf16.msra.mxu0 0
    %2016 = vmatprep.subr.bf16.mxu0 0
    %2017 = vmatpush1.bf16.msra.mxu0 0
    %2018 = vmatprep.subr.bf16.mxu0 0
    %2019 = vmatpush1.bf16.msra.mxu0 0
    %2020 = vmatprep.subr.bf16.mxu0 0
    %2021 = vmatpush1.bf16.msra.mxu0 0
    %2022 = vmatprep.subr.bf16.mxu0 0
    %2023 = vmatpush1.bf16.msra.mxu0 0
    %2024 = vmatprep.subr.bf16.mxu0 0
    %2025 = vmatpush1.bf16.msra.mxu0 0
    %2026 = vmatprep.subr.bf16.mxu0 0
    %2027 = vmatpush1.bf16.msra.mxu0 0
    %2028 = vmatprep.subr.bf16.mxu0 0
    %2029 = vmatpush1.bf16.msra.mxu0 0
    %2030 = vmatprep.subr.bf16.mxu0 0
    %2031 = vmatpush1.bf16.msra.mxu0 0
    %2032 = vmatprep.subr.bf16.mxu0 0
    %2033 = vmatpush1.bf16.msra.mxu0 0
    %2034 = vmatprep.subr.bf16.mxu0 0
    %2035 = vmatpush1.bf16.msra.mxu0 0
    %2036 = vmatprep.subr.bf16.mxu0 0
    %2037 = vmatpush1.bf16.msra.mxu0 0
    %2038 = vmatprep.mubr.bf16.mxu0 0
    %2039 = vmatmul.mubr.bf16.gmra.mrb[0].mxu0 %v305
    %v2040 = vpop.f32.mrb[0].mxu0
    %v2041 = vadd.f32 0.0, %v2040
    %v2042 = vpop.f32.mrb[0].mxu0
    %v2043 = vpop.f32.mrb[0].mxu0
    %v2044 = vadd.f32 0.0, %v2043
    %v2045 = vpop.f32.mrb[0].mxu0
    %2046 = vdwg.mxu0
    %v2047 = vpack.c.bf16 %v2044, %v2041
    %v2064 = vunpack.c.l.b16 %v1849
    %v2065 = vunpack.c.l.b16 %v1850
    %v2066 = vunpack.c.l.b16 %v1851
    %v2067 = vunpack.c.l.b16 %v1852
    %v2068 = vunpack.c.l.b16 %v1853
    %v2069 = vunpack.c.l.b16 %v1854
    %v2070 = vunpack.c.l.b16 %v1855
    %v2071 = vunpack.c.l.b16 %v1856
    %v2072 = vunpack.c.l.b16 %v1857
    %v2073 = vunpack.c.l.b16 %v1858
    %v2074 = vunpack.c.l.b16 %v1859
    %v2075 = vunpack.c.l.b16 %v1860
    %v2076 = vunpack.c.l.b16 %v1861
    %v2077 = vunpack.c.l.b16 %v1862
    %v2078 = vunpack.c.l.b16 %v1863
    %v2079 = vunpack.c.l.b16 %v1864
    %v2080 = vpack.c.b16 %v2065, %v2064
    %v2081 = vpack.c.b16 %v2067, %v2066
    %v2082 = vpack.c.b16 %v2069, %v2068
    %v2083 = vpack.c.b16 %v2071, %v2070
    %v2084 = vpack.c.b16 %v2073, %v2072
    %v2085 = vpack.c.b16 %v2075, %v2074
    %v2086 = vpack.c.b16 %v2077, %v2076
    %v2087 = vpack.c.b16 %v2079, %v2078
    %2096 = vmatprep.subr.bf16.mxu0 0
    %2097 = vmatpush1.bf16.msra.mxu0 %v2080
    %2098 = vmatprep.subr.bf16.mxu0 0
    %2099 = vmatpush1.bf16.msra.mxu0 %v2081
    %2100 = vmatprep.subr.bf16.mxu0 0
    %2101 = vmatpush1.bf16.msra.mxu0 %v2082
    %2102 = vmatprep.subr.bf16.mxu0 0
    %2103 = vmatpush1.bf16.msra.mxu0 %v2083
    %2104 = vmatprep.subr.bf16.mxu0 0
    %2105 = vmatpush1.bf16.msra.mxu0 %v2084
    %2106 = vmatprep.subr.bf16.mxu0 0
    %2107 = vmatpush1.bf16.msra.mxu0 %v2085
    %2108 = vmatprep.subr.bf16.mxu0 0
    %2109 = vmatpush1.bf16.msra.mxu0 %v2086
    %2110 = vmatprep.subr.bf16.mxu0 0
    %2111 = vmatpush1.bf16.msra.mxu0 %v2087
    %2112 = vmatprep.subr.bf16.mxu0 0
    %2113 = vmatpush1.bf16.msra.mxu0 0
    %2114 = vmatprep.subr.bf16.mxu0 0
    %2115 = vmatpush1.bf16.msra.mxu0 0
    %2116 = vmatprep.subr.bf16.mxu0 0
    %2117 = vmatpush1.bf16.msra.mxu0 0
    %2118 = vmatprep.subr.bf16.mxu0 0
    %2119 = vmatpush1.bf16.msra.mxu0 0
    %2120 = vmatprep.subr.bf16.mxu0 0
    %2121 = vmatpush1.bf16.msra.mxu0 0
    %2122 = vmatprep.subr.bf16.mxu0 0
    %2123 = vmatpush1.bf16.msra.mxu0 0
    %2124 = vmatprep.subr.bf16.mxu0 0
    %2125 = vmatpush1.bf16.msra.mxu0 0
    %2126 = vmatprep.subr.bf16.mxu0 0
    %2127 = vmatpush1.bf16.msra.mxu0 0
    %2128 = vmatprep.mubr.bf16.mxu0 0
    %2129 = vmatmul.mubr.bf16.gmra.mrb[0].mxu0 %v2047
    %v2130 = vpop.f32.mrb[0].mxu0
    %v2131 = vadd.f32 0.0, %v2130
    %v2132 = vpop.f32.mrb[0].mxu0
    %v2133 = vpop.f32.mrb[0].mxu0
    %v2134 = vadd.f32 0.0, %v2133
    %v2135 = vpop.f32.mrb[0].mxu0
    %2136 = vdwg.mxu0
    %v2153 = vunpack.c.l.b16 %v1832
    %v2154 = vunpack.c.l.b16 %v1833
    %v2155 = vunpack.c.l.b16 %v1834
    %v2156 = vunpack.c.l.b16 %v1835
    %v2157 = vunpack.c.l.b16 %v1836
    %v2158 = vunpack.c.l.b16 %v1837
    %v2159 = vunpack.c.l.b16 %v1838
    %v2160 = vunpack.c.l.b16 %v1839
    %v2161 = vunpack.c.l.b16 %v1840
    %v2162 = vunpack.c.l.b16 %v1841
    %v2163 = vunpack.c.l.b16 %v1842
    %v2164 = vunpack.c.l.b16 %v1843
    %v2165 = vunpack.c.l.b16 %v1844
    %v2166 = vunpack.c.l.b16 %v1845
    %v2167 = vunpack.c.l.b16 %v1846
    %v2168 = vunpack.c.l.b16 %v1847
    %v2169 = vpack.c.b16 %v2154, %v2153
    %v2170 = vpack.c.b16 %v2156, %v2155
    %v2171 = vpack.c.b16 %v2158, %v2157
    %v2172 = vpack.c.b16 %v2160, %v2159
    %v2173 = vpack.c.b16 %v2162, %v2161
    %v2174 = vpack.c.b16 %v2164, %v2163
    %v2175 = vpack.c.b16 %v2166, %v2165
    %v2176 = vpack.c.b16 %v2168, %v2167
    %2185 = vmatprep.subr.bf16.mxu0 0
    %2186 = vmatpush1.bf16.msra.mxu0 %v2169
    %2187 = vmatprep.subr.bf16.mxu0 0
    %2188 = vmatpush1.bf16.msra.mxu0 %v2170
    %2189 = vmatprep.subr.bf16.mxu0 0
    %2190 = vmatpush1.bf16.msra.mxu0 %v2171
    %2191 = vmatprep.subr.bf16.mxu0 0
    %2192 = vmatpush1.bf16.msra.mxu0 %v2172
    %2193 = vmatprep.subr.bf16.mxu0 0
    %2194 = vmatpush1.bf16.msra.mxu0 %v2173
    %2195 = vmatprep.subr.bf16.mxu0 0
    %2196 = vmatpush1.bf16.msra.mxu0 %v2174
    %2197 = vmatprep.subr.bf16.mxu0 0
    %2198 = vmatpush1.bf16.msra.mxu0 %v2175
    %2199 = vmatprep.subr.bf16.mxu0 0
    %2200 = vmatpush1.bf16.msra.mxu0 %v2176
    %2201 = vmatprep.subr.bf16.mxu0 0
    %2202 = vmatpush1.bf16.msra.mxu0 0
    %2203 = vmatprep.subr.bf16.mxu0 0
    %2204 = vmatpush1.bf16.msra.mxu0 0
    %2205 = vmatprep.subr.bf16.mxu0 0
    %2206 = vmatpush1.bf16.msra.mxu0 0
    %2207 = vmatprep.subr.bf16.mxu0 0
    %2208 = vmatpush1.bf16.msra.mxu0 0
    %2209 = vmatprep.subr.bf16.mxu0 0
    %2210 = vmatpush1.bf16.msra.mxu0 0
    %2211 = vmatprep.subr.bf16.mxu0 0
    %2212 = vmatpush1.bf16.msra.mxu0 0
    %2213 = vmatprep.subr.bf16.mxu0 0
    %2214 = vmatpush1.bf16.msra.mxu0 0
    %2215 = vmatprep.subr.bf16.mxu0 0
    %2216 = vmatpush1.bf16.msra.mxu0 0
    %2217 = vmatprep.mubr.bf16.mxu0 0
    %2218 = vmatmul.mubr.bf16.gmra.mrb[0].mxu0 %v1813
    %v2219 = vpop.f32.mrb[0].mxu0
    %v2220 = vadd.f32 %v2131, %v2219
    %v2221 = vpop.f32.mrb[0].mxu0
    %v2222 = vpop.f32.mrb[0].mxu0
    %v2223 = vadd.f32 %v2134, %v2222
    %v2224 = vpop.f32.mrb[0].mxu0
    %2225 = vdwg.mxu0
    %s2226 = scalar_lea.vmem %s5, 4
    %v2227 = vld [vmem:[%s2226] sm:$0x1]
    %v2229 = vlaneseq
    %v2230 = vshrl.u32 %v2229, 7
    %v2231 = vsub.s32 0, %v2230
    %v2232 = vrot.slane %v2227, %v2231
    %v2234 = vadd.f32 %v2220, %v2232
    %v2235 = vadd.f32 %v2223, %v2232
    %v2236 = vmax.f32 %v2234, 0.0
    %v2237 = vmax.f32 %v2235, 0.0
    %v2238 = vpack.c.bf16 %v2237, %v2236
    %s2239 = scalar_lea.vmem [#allocation8], 960
    %v2240 = vld [vmem:[%s2239] sm:$0xf]
    %v2241 = vld [vmem:[%s2239 + $0x4] sm:$0xf]
    %v2242 = vld [vmem:[%s2239 + $0x8] sm:$0xf]
    %v2243 = vld [vmem:[%s2239 + $0xc] sm:$0xf]
    %v2244 = vld [vmem:[%s2239 + $0x10] sm:$0xf]
    %v2245 = vld [vmem:[%s2239 + $0x14] sm:$0xf]
    %v2246 = vld [vmem:[%s2239 + $0x18] sm:$0xf]
    %v2247 = vld [vmem:[%s2239 + $0x1c] sm:$0xf]
    %v2248 = vld [vmem:[%s2239 + $0x20] sm:$0xf]
    %v2249 = vld [vmem:[%s2239 + $0x24] sm:$0xf]
    %v2250 = vld [vmem:[%s2239 + $0x28] sm:$0xf]
    %v2251 = vld [vmem:[%s2239 + $0x2c] sm:$0xf]
    %v2252 = vld [vmem:[%s2239 + $0x30] sm:$0xf]
    %v2253 = vld [vmem:[%s2239 + $0x34] sm:$0xf]
    %v2254 = vld [vmem:[%s2239 + $0x38] sm:$0xf]
    %v2255 = vld [vmem:[%s2239 + $0x3c] sm:$0xf]
    %s2256 = scalar_lea.vmem %s5, 5
    %v2257 = vld [vmem:[%s2256] sm:$0x1]
    %v2259 = vlaneseq
    %v2260 = vshrl.u32 %v2259, 7
    %v2261 = vsub.s32 0, %v2260
    %v2262 = vrot.slane %v2257, %v2261
    %v2280 = vunpack.c.l.b16 %v2240
    %v2281 = vunpack.c.l.b16 %v2241
    %v2282 = vunpack.c.l.b16 %v2242
    %v2283 = vunpack.c.l.b16 %v2243
    %v2284 = vunpack.c.l.b16 %v2244
    %v2285 = vunpack.c.l.b16 %v2245
    %v2286 = vunpack.c.l.b16 %v2246
    %v2287 = vunpack.c.l.b16 %v2247
    %v2288 = vunpack.c.l.b16 %v2248
    %v2289 = vunpack.c.l.b16 %v2249
    %v2290 = vunpack.c.l.b16 %v2250
    %v2291 = vunpack.c.l.b16 %v2251
    %v2292 = vunpack.c.l.b16 %v2252
    %v2293 = vunpack.c.l.b16 %v2253
    %v2294 = vunpack.c.l.b16 %v2254
    %v2295 = vunpack.c.l.b16 %v2255
    %v2296 = vpack.c.b16 %v2281, %v2280
    %v2297 = vpack.c.b16 %v2283, %v2282
    %v2298 = vpack.c.b16 %v2285, %v2284
    %v2299 = vpack.c.b16 %v2287, %v2286
    %v2300 = vpack.c.b16 %v2289, %v2288
    %v2301 = vpack.c.b16 %v2291, %v2290
    %v2302 = vpack.c.b16 %v2293, %v2292
    %v2303 = vpack.c.b16 %v2295, %v2294
    %2312 = vmatprep.subr.bf16.mxu0 0
    %2313 = vmatpush1.bf16.msra.mxu0 %v2296
    %2314 = vmatprep.subr.bf16.mxu0 0
    %2315 = vmatpush1.bf16.msra.mxu0 %v2297
    %2316 = vmatprep.subr.bf16.mxu0 0
    %2317 = vmatpush1.bf16.msra.mxu0 %v2298
    %2318 = vmatprep.subr.bf16.mxu0 0
    %2319 = vmatpush1.bf16.msra.mxu0 %v2299
    %2320 = vmatprep.subr.bf16.mxu0 0
    %2321 = vmatpush1.bf16.msra.mxu0 %v2300
    %2322 = vmatprep.subr.bf16.mxu0 0
    %2323 = vmatpush1.bf16.msra.mxu0 %v2301
    %2324 = vmatprep.subr.bf16.mxu0 0
    %2325 = vmatpush1.bf16.msra.mxu0 %v2302
    %2326 = vmatprep.subr.bf16.mxu0 0
    %2327 = vmatpush1.bf16.msra.mxu0 %v2303
    %2328 = vmatprep.subr.bf16.mxu0 0
    %2329 = vmatpush1.bf16.msra.mxu0 0
    %2330 = vmatprep.subr.bf16.mxu0 0
    %2331 = vmatpush1.bf16.msra.mxu0 0
    %2332 = vmatprep.subr.bf16.mxu0 0
    %2333 = vmatpush1.bf16.msra.mxu0 0
    %2334 = vmatprep.subr.bf16.mxu0 0
    %2335 = vmatpush1.bf16.msra.mxu0 0
    %2336 = vmatprep.subr.bf16.mxu0 0
    %2337 = vmatpush1.bf16.msra.mxu0 0
    %2338 = vmatprep.subr.bf16.mxu0 0
    %2339 = vmatpush1.bf16.msra.mxu0 0
    %2340 = vmatprep.subr.bf16.mxu0 0
    %2341 = vmatpush1.bf16.msra.mxu0 0
    %2342 = vmatprep.subr.bf16.mxu0 0
    %2343 = vmatpush1.bf16.msra.mxu0 0
    %2344 = vmatprep.mubr.bf16.mxu0 0
    %2345 = vmatmul.mubr.bf16.gmra.mrb[0].mxu0 %v2238
    %v2346 = vpop.f32.mrb[0].mxu0
    %v2347 = vadd.f32 %v2262, %v2346
    %v2348 = vpop.f32.mrb[0].mxu0
    %v2349 = vpop.f32.mrb[0].mxu0
    %v2350 = vadd.f32 %v2262, %v2349
    %v2351 = vpop.f32.mrb[0].mxu0
    %2352 = vdwg.mxu0
    %v2353 = vmax.f32 %v2347, 0.0
    %v2354 = vmax.f32 %v2350, 0.0
    %v2355 = vpack.c.bf16 %v2354, %v2353
    %s2356 = scalar_lea.vmem [#allocation8], 1024
    %v2357 = vld [vmem:[%s2356] sm:$0xf]
    %v2358 = vld [vmem:[%s2356 + $0x4] sm:$0xf]
    %v2359 = vld [vmem:[%s2356 + $0x8] sm:$0xf]
    %v2360 = vld [vmem:[%s2356 + $0xc] sm:$0xf]
    %v2361 = vld [vmem:[%s2356 + $0x10] sm:$0xf]
    %v2362 = vld [vmem:[%s2356 + $0x14] sm:$0xf]
    %v2363 = vld [vmem:[%s2356 + $0x18] sm:$0xf]
    %v2364 = vld [vmem:[%s2356 + $0x1c] sm:$0xf]
    %v2365 = vld [vmem:[%s2356 + $0x20] sm:$0xf]
    %v2366 = vld [vmem:[%s2356 + $0x24] sm:$0xf]
    %v2367 = vld [vmem:[%s2356 + $0x28] sm:$0xf]
    %v2368 = vld [vmem:[%s2356 + $0x2c] sm:$0xf]
    %v2369 = vld [vmem:[%s2356 + $0x30] sm:$0xf]
    %v2370 = vld [vmem:[%s2356 + $0x34] sm:$0xf]
    %v2371 = vld [vmem:[%s2356 + $0x38] sm:$0xf]
    %v2372 = vld [vmem:[%s2356 + $0x3c] sm:$0xf]
    %s2373 = scalar_lea.vmem %s5, 6
    %v2374 = vld [vmem:[%s2373] sm:$0x1]
    %v2376 = vlaneseq
    %v2377 = vshrl.u32 %v2376, 7
    %v2378 = vsub.s32 0, %v2377
    %v2379 = vrot.slane %v2374, %v2378
    %v2397 = vunpack.c.l.b16 %v2357
    %v2398 = vunpack.c.l.b16 %v2358
    %v2399 = vunpack.c.l.b16 %v2359
    %v2400 = vunpack.c.l.b16 %v2360
    %v2401 = vunpack.c.l.b16 %v2361
    %v2402 = vunpack.c.l.b16 %v2362
    %v2403 = vunpack.c.l.b16 %v2363
    %v2404 = vunpack.c.l.b16 %v2364
    %v2405 = vunpack.c.l.b16 %v2365
    %v2406 = vunpack.c.l.b16 %v2366
    %v2407 = vunpack.c.l.b16 %v2367
    %v2408 = vunpack.c.l.b16 %v2368
    %v2409 = vunpack.c.l.b16 %v2369
    %v2410 = vunpack.c.l.b16 %v2370
    %v2411 = vunpack.c.l.b16 %v2371
    %v2412 = vunpack.c.l.b16 %v2372
    %v2413 = vpack.c.b16 %v2398, %v2397
    %v2414 = vpack.c.b16 %v2400, %v2399
    %v2415 = vpack.c.b16 %v2402, %v2401
    %v2416 = vpack.c.b16 %v2404, %v2403
    %v2417 = vpack.c.b16 %v2406, %v2405
    %v2418 = vpack.c.b16 %v2408, %v2407
    %v2419 = vpack.c.b16 %v2410, %v2409
    %v2420 = vpack.c.b16 %v2412, %v2411
    %2429 = vmatprep.subr.bf16.mxu0 0
    %2430 = vmatpush1.bf16.msra.mxu0 %v2413
    %2431 = vmatprep.subr.bf16.mxu0 0
    %2432 = vmatpush1.bf16.msra.mxu0 %v2414
    %2433 = vmatprep.subr.bf16.mxu0 0
    %2434 = vmatpush1.bf16.msra.mxu0 %v2415
    %2435 = vmatprep.subr.bf16.mxu0 0
    %2436 = vmatpush1.bf16.msra.mxu0 %v2416
    %2437 = vmatprep.subr.bf16.mxu0 0
    %2438 = vmatpush1.bf16.msra.mxu0 %v2417
    %2439 = vmatprep.subr.bf16.mxu0 0
    %2440 = vmatpush1.bf16.msra.mxu0 %v2418
    %2441 = vmatprep.subr.bf16.mxu0 0
    %2442 = vmatpush1.bf16.msra.mxu0 %v2419
    %2443 = vmatprep.subr.bf16.mxu0 0
    %2444 = vmatpush1.bf16.msra.mxu0 %v2420
    %2445 = vmatprep.subr.bf16.mxu0 0
    %2446 = vmatpush1.bf16.msra.mxu0 0
    %2447 = vmatprep.subr.bf16.mxu0 0
    %2448 = vmatpush1.bf16.msra.mxu0 0
    %2449 = vmatprep.subr.bf16.mxu0 0
    %2450 = vmatpush1.bf16.msra.mxu0 0
    %2451 = vmatprep.subr.bf16.mxu0 0
    %2452 = vmatpush1.bf16.msra.mxu0 0
    %2453 = vmatprep.subr.bf16.mxu0 0
    %2454 = vmatpush1.bf16.msra.mxu0 0
    %2455 = vmatprep.subr.bf16.mxu0 0
    %2456 = vmatpush1.bf16.msra.mxu0 0
    %2457 = vmatprep.subr.bf16.mxu0 0
    %2458 = vmatpush1.bf16.msra.mxu0 0
    %2459 = vmatprep.subr.bf16.mxu0 0
    %2460 = vmatpush1.bf16.msra.mxu0 0
    %2461 = vmatprep.mubr.bf16.mxu0 0
    %2462 = vmatmul.mubr.bf16.gmra.mrb[0].mxu0 %v2355
    %v2463 = vpop.f32.mrb[0].mxu0
    %v2464 = vadd.f32 %v2379, %v2463
    %v2465 = vpop.f32.mrb[0].mxu0
    %v2466 = vpop.f32.mrb[0].mxu0
    %v2467 = vadd.f32 %v2379, %v2466
    %v2468 = vpop.f32.mrb[0].mxu0
    %2469 = vdwg.mxu0
    %2470 = vst [vmem:[#allocation11] sm:$0xff] %v2464
    %2471 = vst [vmem:[#allocation11 + $0x8] sm:$0xff] %v2467
    // Predicated region
    $region46: #{tpu_custom_call.1} parent=1 // pred_check
      _
    $region47: #{tpu_custom_call.1} parent=1 // pred_check_branch
      %2473 = sbr.rel (0) target = $region49
    $region48: #{tpu_custom_call.1} parent=1 // pred_region
      %s2475 = ssub.s32 256, 256
      %2476 = vsyncadd [#allocation4], %s2475
      %s2477 = sshll.u32 [#allocation11], 4
      %s2478 = int_to_ptr.vmem [resolvable:$true] %s2477
      %2483 = dma.vmem_to_hbm [thread:$0]  %s2478, 256, %s6, [#allocation4], 128, 128, 8
    $region49: #{tpu_custom_call.1} parent=1 // pred_fallthru
      _
    // Predicated region
    $region50: #{tpu_custom_call.1} parent=1 // pred_check
      _
    $region51: #{tpu_custom_call.1} parent=1 // pred_check_branch
      %2485 = sbr.rel (0) target = $region53
    $region52: #{tpu_custom_call.1} parent=1 // pred_region
      %2486 = dma.done [#allocation4], 256
    $region53: #{tpu_custom_call.1} parent=1 // pred_fallthru
      _
    %2487 = vsyncpa [#allocation3], 1
    %2488 = vsyncpa [#allocation6], 1
    %2489 = vsyncpa [#allocation9], 1
    %2490 = vsyncpa [#allocation4], 1

</llo_original>
